<compile_context>
chip_gen: v7x
topology: tpu7x:2x2x1
jax: 0.10.0
libtpu: 0.0.40
codegen_flags: <defaults>
</compile_context>

<pallas_src>
import jax
import jax.numpy as jnp
from jax import lax
from jax.experimental import pallas as pl
from jax.experimental.pallas import tpu as pltpu


# ---------------------------------------------------------------------------
# Tunables (sized for the scoped-VMEM defaults: v5e 16 MiB, v6e 32, v7x 32)
# ---------------------------------------------------------------------------
_PALLAS_MIN_ROWS = 1024          # below this a kernel launch can't beat XLA's GEMV
_X_TILE_BYTES_BUDGET = 6 << 20   # per-buffer budget for (x tile + its output slice);
                                 # double-buffered ~12 MiB stays under v5e's 16 MiB
_MIN_TILE_ROWS = 1024            # floor: keep per-step DMA >> ~0.35 us step overhead
_TARGET_GRID_STEPS = 8           # aim for >= 8 grid steps (v7x uses both TCs, pipeline ramps)


def _round_up(x, m):
    return -(-x // m) * m


def _pick_tile(rows, bytes_per_row):
    """Row-tile size: multiple of 128, VMEM-budget bound, >= _TARGET_GRID_STEPS steps."""
    budget = max(128, (_X_TILE_BYTES_BUDGET // bytes_per_row) // 128 * 128)
    target = _round_up(-(-rows // _TARGET_GRID_STEPS), 128)
    tile = min(budget, max(_MIN_TILE_ROWS, target))
    tile = min(tile, _round_up(rows, 128))     # never bigger than needed
    return max(tile, 128)


# ---------------------------------------------------------------------------
# Kernels
# ---------------------------------------------------------------------------
def _linear_mean_kernel(b_ref, x_ref, w_ref, o_ref):
    """Generic path.  x_ref (tile_n, D) VMEM, w_ref (1, D) f32, o_ref (1, tile_n)."""
    acc = lax.dot_general(
        w_ref[...], x_ref[...].astype(jnp.float32),
        dimension_numbers=(((1,), (1,)), ((), ())),      # contract over D on the MXU
        preferred_element_type=jnp.float32,
        precision=lax.Precision.HIGHEST,                 # exact f32: free, MXU is idle
    )                                                    # (1, tile_n)
    o_ref[...] = (acc + b_ref[0, 0]).astype(o_ref.dtype)


def _linear_mean_packed_kernel(b_ref, xp_ref, w_ref, o_ref):
    """Lane-dense path.  xp_ref (tile_g, 128) holds `pack` logical rows per lane-row;
    w_ref (pack, 128) holds `pack` shifted copies of w; o_ref (1, pack, tile_g)."""
    acc = lax.dot_general(
        w_ref[...], xp_ref[...].astype(jnp.float32),
        dimension_numbers=(((1,), (1,)), ((), ())),      # contract over the 128 lanes
        preferred_element_type=jnp.float32,
        precision=lax.Precision.HIGHEST,
    )                                                    # (pack, tile_g), lane-dense
    o_ref[0] = (acc + b_ref[0, 0]).astype(o_ref.dtype)


# ---------------------------------------------------------------------------
# Wrapper
# ---------------------------------------------------------------------------
def non_zero_mean_forward(x, weights, bias, *, force_pallas=False):
    """m(x) = x @ weights + bias.   x: (N, D), weights: (D,), bias: scalar -> (N,)."""
    N, D = x.shape
    itemsize = jnp.dtype(x.dtype).itemsize
    w_f32 = jnp.asarray(weights, jnp.float32).reshape(D)     # keep hyperparameters in f32
    b_f32 = jnp.asarray(bias, jnp.float32).reshape(1, 1)

    # Tiny-input bypass: launch + pipeline spin-up dwarfs N*D FLOPs.
    if not force_pallas and N < _PALLAS_MIN_ROWS:
        y = jnp.dot(x.astype(jnp.float32), w_f32, precision=lax.Precision.HIGHEST)
        return (y + b_f32[0, 0]).astype(x.dtype)

    cparams = pltpu.CompilerParams(dimension_semantics=("parallel",))
    cost = pl.CostEstimate(flops=2 * N * D, transcendentals=0,
                           bytes_accessed=N * D * itemsize + N * itemsize)

    pack = 128 // D if (D <= 128 and 128 % D == 0) else 1
    if pack > 1 and N % pack == 0:
        # ---------------- lane-dense packed path -------------------------
        G = N // pack
        xp = x.reshape(G, 128)                               # contiguous view: no HBM copy
        # (pack, 128): row j holds w at columns [j*D, (j+1)*D), zeros elsewhere.
        wp = jnp.kron(jnp.eye(pack, dtype=jnp.float32), w_f32.reshape(1, D))
        tile_g = _pick_tile(G, (128 + pack) * itemsize)      # x row + output slice per group
        num_tiles = -(-G // tile_g)                          # trailing block may over-run G
        out = pl.pallas_call(
            _linear_mean_packed_kernel,
            out_shape=jax.ShapeDtypeStruct((num_tiles, pack, tile_g), x.dtype),
            grid_spec=pltpu.PrefetchScalarGridSpec(
                num_scalar_prefetch=0,
                grid=(num_tiles,),
                in_specs=[
                    pl.BlockSpec(memory_space=pltpu.SMEM),           # bias (1, 1) scalar
                    pl.BlockSpec((tile_g, 128), lambda i: (i, 0)),   # streamed, lane-dense x
                    pl.BlockSpec((pack, 128), lambda i: (0, 0)),     # resident weights
                ],
                out_specs=pl.BlockSpec((1, pack, tile_g), lambda i: (i, 0, 0)),
            ),
            compiler_params=cparams,
            cost_estimate=cost,
        )(b_f32, xp, wp)
        # Un-interleave (num_tiles, pack, tile_g) -> row order; touches only ~N*4 bytes.
        return out.transpose(0, 2, 1).reshape(-1)[:N]

    # ---------------- generic path (any D, any N) -------------------------
    lane_padded_row = _round_up(D, 128) * itemsize           # true VMEM cost per row (D < 128 pads)
    tile_n = _pick_tile(N, lane_padded_row + itemsize)
    num_tiles = -(-N // tile_n)                              # trailing block over-runs N (rows sliced off)
    out = pl.pallas_call(
        _linear_mean_kernel,
        out_shape=jax.ShapeDtypeStruct((num_tiles, tile_n), x.dtype),
        grid_spec=pltpu.PrefetchScalarGridSpec(
            num_scalar_prefetch=0,
            grid=(num_tiles,),
            in_specs=[
                pl.BlockSpec(memory_space=pltpu.SMEM),               # bias (1, 1) scalar
                pl.BlockSpec((tile_n, D), lambda i: (i, 0)),         # streamed x tile
                pl.BlockSpec((1, D), lambda i: (0, 0)),              # resident weights
            ],
            out_specs=pl.BlockSpec((1, tile_n), lambda i: (i, 0)),   # lane-dense output row
        ),
        compiler_params=cparams,
        cost_estimate=cost,
    )(b_f32, x, w_f32.reshape(1, D))
    return out.reshape(-1)[:N]


# TODO(synk): NonZeroMean itself is abstract (no forward math); only the
# concrete linear mean is kernelized here.
class NonZeroMeanLinear:
    """Concrete JAX/Pallas counterpart of the abstract NonZeroMean module
    (linear mean). Hyperparameters packed as [w_0, ..., w_{D-1}, bias]."""

    def __init__(self, num_features: int):
        self.num_features = num_features
        self.num_hyperparameters = num_features + 1
        # deterministic init (synthetic; no checkpoint load)
        self._weights = jnp.arange(1, num_features + 1, dtype=jnp.float32) * 0.01
        self._bias = jnp.float32(0.5)

    def set_parameters(self, parameters):
        parameters = jnp.asarray(parameters, jnp.float32).reshape(-1)
        assert parameters.shape[0] == self.num_hyperparameters
        self._weights = parameters[: self.num_features]
        self._bias = parameters[self.num_features]

    def get_named_parameters(self):
        return {"weights": self._weights, "bias": self._bias}

    def forward(self, x):
        return non_zero_mean_forward(x, self._weights, self._bias)

    def __call__(self, x):
        return self.forward(x)


if __name__ == "__main__":
    key = jax.random.PRNGKey(0)
    D = 32                 # feature dim -> pack = 4 logical rows per 128-lane row
    N = 2000               # multiple of pack -> lane-dense packed kernel path
    x = jax.random.normal(key, (N, D), dtype=jnp.float32)

    mean_module = NonZeroMeanLinear(num_features=D)
    out = jax.block_until_ready(mean_module(x))          # packed Pallas path (N >= 1024)

    ref = jnp.dot(x, mean_module._weights, precision=lax.Precision.HIGHEST) \
        + mean_module._bias
    assert out.shape == (N,)
    assert jnp.allclose(out, ref, atol=1e-5, rtol=1e-5), \
        float(jnp.max(jnp.abs(out - ref)))

    # Row count not divisible by pack -> generic kernel path (forced through Pallas),
    # exercising the unpadded ragged trailing block.
    x_odd = jax.random.normal(jax.random.PRNGKey(1), (1001, D), dtype=jnp.float32)
    out_odd = jax.block_until_ready(
        non_zero_mean_forward(x_odd, mean_module._weights, mean_module._bias,
                              force_pallas=True))
    ref_odd = jnp.dot(x_odd, mean_module._weights, precision=lax.Precision.HIGHEST) \
        + mean_module._bias
    assert out_odd.shape == (1001,)
    assert jnp.allclose(out_odd, ref_odd, atol=1e-5, rtol=1e-5), \
        float(jnp.max(jnp.abs(out_odd - ref_odd)))

    # Tiny-input fast path (bypasses Pallas) still matches the reference.
    x_small = jax.random.normal(jax.random.PRNGKey(2), (8, D), dtype=jnp.float32)
    out_small = jax.block_until_ready(mean_module(x_small))
    ref_small = x_small @ mean_module._weights + mean_module._bias
    assert out_small.shape == (8,)
    assert jnp.allclose(out_small, ref_small, atol=1e-5, rtol=1e-5)

    print("KERNEL_OK")
</pallas_src>

<mosaic_0001>
module attributes {stable_mosaic.version = 11 : i64} {
  func.func @_linear_mean_packed_kernel(%arg0: i32, %arg1: memref<1x1xf32, #tpu.memory_space<smem>>, %arg2: memref<512x128xf32, #tpu.memory_space<vmem>>, %arg3: memref<4x128xf32, #tpu.memory_space<vmem>>, %arg4: memref<1x4x512xf32, #tpu.memory_space<vmem>>) attributes {dimension_semantics = [#tpu.dimension_semantics<parallel>], iteration_bounds = array<i64: 1>, scalar_prefetch = 0 : i64, scratch_operands = 0 : i64, tpu.core_type = #tpu.core_type<tc>, window_params = [{transform_indices = @transform_0, window_bounds = array<i64: 1, 1>}, {transform_indices = @transform_1, window_bounds = array<i64: 512, 128>}, {pipeline_mode = #tpu.pipeline_mode<synchronous>, transform_indices = @transform_2, window_bounds = array<i64: 4, 128>}, {transform_indices = @transform_3, window_bounds = array<i64: 1, 4, 512>}]} {
    %c0 = arith.constant 0 : index
    %c0_0 = arith.constant 0 : index
    %0 = vector.load %arg3[%c0, %c0_0] : memref<4x128xf32, #tpu.memory_space<vmem>>, vector<4x128xf32>
    %c0_1 = arith.constant 0 : index
    %c0_2 = arith.constant 0 : index
    %1 = vector.load %arg2[%c0_1, %c0_2] : memref<512x128xf32, #tpu.memory_space<vmem>>, vector<512x128xf32>
    %cst = arith.constant dense<0.000000e+00> : vector<4x512xf32>
    %2 = tpu.matmul %0, %1, %cst {dimension_numbers = #tpu.dot_dimension_numbers<[1], [1], [0], [0], [0, 0, 1, 0], [], []>, precision = #tpu.contract_precision<fp32>} : vector<4x128xf32>, vector<512x128xf32>, vector<4x512xf32> -> vector<4x512xf32>
    %c0_3 = arith.constant 0 : index
    %c0_4 = arith.constant 0 : index
    %3 = memref.load %arg1[%c0_3, %c0_4] : memref<1x1xf32, #tpu.memory_space<smem>>
    %4 = vector.broadcast %3 : f32 to vector<4x512xf32>
    %5 = arith.addf %2, %4 : vector<4x512xf32>
    %c0_5 = arith.constant 0 : index
    %c0_6 = arith.constant 0 : index
    %c0_7 = arith.constant 0 : index
    %6 = vector.load %arg4[%c0_5, %c0_6, %c0_7] : memref<1x4x512xf32, #tpu.memory_space<vmem>>, vector<1x4x512xf32>
    %7 = vector.shape_cast %6 : vector<1x4x512xf32> to vector<4x512xf32>
    %8 = vector.shape_cast %5 : vector<4x512xf32> to vector<1x4x512xf32>
    tpu.vector_store %arg4[%c0_5, %c0_6, %c0_7], %8 {strides = array<i32>} : memref<1x4x512xf32, #tpu.memory_space<vmem>>, vector<1x4x512xf32>,
    return
  }
  func.func @transform_0(%arg0: i32) -> (i32, i32) {
    %c0_i32 = arith.constant 0 : i32
    %c0_i32_0 = arith.constant 0 : i32
    %c0_i32_1 = arith.constant 0 : i32
    return %c0_i32, %c0_i32_0 : i32, i32
  }
  func.func @transform_1(%arg0: i32) -> (i32, i32) {
    %c0_i32 = arith.constant 0 : i32
    %c0_i32_0 = arith.constant 0 : i32
    return %arg0, %c0_i32 : i32, i32
  }
  func.func @transform_2(%arg0: i32) -> (i32, i32) {
    %c0_i32 = arith.constant 0 : i32
    %c0_i32_0 = arith.constant 0 : i32
    %c0_i32_1 = arith.constant 0 : i32
    return %c0_i32, %c0_i32_0 : i32, i32
  }
  func.func @transform_3(%arg0: i32) -> (i32, i32, i32) {
    %c0_i32 = arith.constant 0 : i32
    %c0_i32_0 = arith.constant 0 : i32
    %c0_i32_1 = arith.constant 0 : i32
    return %arg0, %c0_i32, %c0_i32_0 : i32, i32, i32
  }
}

</mosaic_0001>

<llo_original>
// kernel: tpu_custom_call.1
$region0: #{tpu_custom_call.1}
  #allocation0 [shape = 'u32[]', space=smem, size = 0x4, offset = 0x4, fixed_abs, tag = 'smem constant byte address 0x4 - core index']
  #allocation1 [shape = 'u32[144,128]{1,0:T(1,128)}', space=vmem, size = 0x12000, scoped, tag = 'internal scratch']
  #allocation2 [shape = 'f32[1,1]{1,0:T(1,128)S(6)}', space=smem, size = 0x200, scoped, tag = 'scoped memory for tpu_custom_call.1']
  %s0 = inlined_call_operand.<no memory space> [shape: f32[1,1], index: 0, kind: input, shape index: {}]
  %s1 = inlined_call_operand.hbm [shape: f32[500,128], index: 1, kind: input, shape index: {}]
  %s2 = inlined_call_operand.vmem [shape: f32[4,128], index: 2, kind: input, shape index: {}]
  %s3 = inlined_call_operand.hbm [shape: f32[1,4,512], index: 3, kind: output, shape index: {}]
  %s4 = sld [smem:[#allocation0]]
  $region26: #{tpu_custom_call.1} parent=0
    _
  %s6 = ssub.s32 1, %s4
  %s7 = scalar_select 0, %s6, %s4
  %8 = sst [smem:[#allocation2]] %s0
  $region1: #{tpu_custom_call.1} parent=0
    #allocation3 [shape = 'u8[262144]{0}', space=vmem, size = 0x40000, scoped, tag = 'input window, operand 1, single buffered']
    #allocation4 [shape = 's32[1]{0}', space=sflag, size = 0x4, scoped, tag = 'scoped memory for tpu_custom_call.1']
    #allocation5 [shape = 's32[1]{0}', space=sflag, size = 0x4, scoped, tag = 'scoped memory for tpu_custom_call.1']
    #allocation6 [shape = 'u8[8192]{0}', space=vmem, size = 0x2000, scoped, tag = 'output window, operand 0, single buffered']
    %9 = vsyncpa [#allocation4], 0
    %10 = vsyncpa [#allocation5], 0
    // Predicated region
    $region2: #{tpu_custom_call.1} parent=1 // pred_check
      _
    $region3: #{tpu_custom_call.1} parent=1 // pred_check_branch
      %12 = sbr.rel (0) target = $region5
    $region4: #{tpu_custom_call.1} parent=1 // pred_region
      _
    $region5: #{tpu_custom_call.1} parent=1 // pred_fallthru
      _
    // Predicated region
    $region6: #{tpu_custom_call.1} parent=1 // pred_check
      _
    $region7: #{tpu_custom_call.1} parent=1 // pred_check_branch
      %14 = sbr.rel (0) target = $region9
    $region8: #{tpu_custom_call.1} parent=1 // pred_region
      %s16 = ssub.s32 8192, 8064
      %17 = vsyncadd [#allocation4], %s16
      %s18 = sshll.u32 [#allocation3], 4
      %s19 = int_to_ptr.vmem [resolvable:$true] %s18
      %24 = dma.hbm_to_vmem [thread:$0]  %s1, 8064, %s19, [#allocation4], 128, 128, 8
    $region9: #{tpu_custom_call.1} parent=1 // pred_fallthru
      _
    // Predicated region
    $region10: #{tpu_custom_call.1} parent=1 // pred_check
      _
    $region11: #{tpu_custom_call.1} parent=1 // pred_check_branch
      %26 = sbr.rel (0) target = $region13
    $region12: #{tpu_custom_call.1} parent=1 // pred_region
      _
    $region13: #{tpu_custom_call.1} parent=1 // pred_fallthru
      _
    // Predicated region
    $region14: #{tpu_custom_call.1} parent=1 // pred_check
      _
    $region15: #{tpu_custom_call.1} parent=1 // pred_check_branch
      %28 = sbr.rel (0) target = $region17
    $region16: #{tpu_custom_call.1} parent=1 // pred_region
      %29 = dma.done [#allocation4], 8192
    $region17: #{tpu_custom_call.1} parent=1 // pred_fallthru
      _
    %v30 = vld [vmem:[%s2] sm:$0xf]
    %v31 = vld [vmem:[#allocation3] sm:$0xff]
    %v32 = vld [vmem:[#allocation3 + $0x8] sm:$0xff]
    %v33 = vld [vmem:[#allocation3 + $0x10] sm:$0xff]
    %v34 = vld [vmem:[#allocation3 + $0x18] sm:$0xff]
    %v35 = vld [vmem:[#allocation3 + $0x20] sm:$0xff]
    %v36 = vld [vmem:[#allocation3 + $0x28] sm:$0xff]
    %v37 = vld [vmem:[#allocation3 + $0x30] sm:$0xff]
    %v38 = vld [vmem:[#allocation3 + $0x38] sm:$0xff]
    %v39 = vld [vmem:[#allocation3 + $0x40] sm:$0xff]
    %v40 = vld [vmem:[#allocation3 + $0x48] sm:$0xff]
    %v41 = vld [vmem:[#allocation3 + $0x50] sm:$0xff]
    %v42 = vld [vmem:[#allocation3 + $0x58] sm:$0xff]
    %v43 = vld [vmem:[#allocation3 + $0x60] sm:$0xff]
    %v44 = vld [vmem:[#allocation3 + $0x68] sm:$0xff]
    %v45 = vld [vmem:[#allocation3 + $0x70] sm:$0xff]
    %v46 = vld [vmem:[#allocation3 + $0x78] sm:$0xff]
    %v47 = vld [vmem:[#allocation3 + $0x80] sm:$0xff]
    %v48 = vld [vmem:[#allocation3 + $0x88] sm:$0xff]
    %v49 = vld [vmem:[#allocation3 + $0x90] sm:$0xff]
    %v50 = vld [vmem:[#allocation3 + $0x98] sm:$0xff]
    %v51 = vld [vmem:[#allocation3 + $0xa0] sm:$0xff]
    %v52 = vld [vmem:[#allocation3 + $0xa8] sm:$0xff]
    %v53 = vld [vmem:[#allocation3 + $0xb0] sm:$0xff]
    %v54 = vld [vmem:[#allocation3 + $0xb8] sm:$0xff]
    %v55 = vld [vmem:[#allocation3 + $0xc0] sm:$0xff]
    %v56 = vld [vmem:[#allocation3 + $0xc8] sm:$0xff]
    %v57 = vld [vmem:[#allocation3 + $0xd0] sm:$0xff]
    %v58 = vld [vmem:[#allocation3 + $0xd8] sm:$0xff]
    %v59 = vld [vmem:[#allocation3 + $0xe0] sm:$0xff]
    %v60 = vld [vmem:[#allocation3 + $0xe8] sm:$0xff]
    %v61 = vld [vmem:[#allocation3 + $0xf0] sm:$0xff]
    %v62 = vld [vmem:[#allocation3 + $0xf8] sm:$0xff]
    %v63 = vld [vmem:[#allocation3 + $0x100] sm:$0xff]
    %v64 = vld [vmem:[#allocation3 + $0x108] sm:$0xff]
    %v65 = vld [vmem:[#allocation3 + $0x110] sm:$0xff]
    %v66 = vld [vmem:[#allocation3 + $0x118] sm:$0xff]
    %v67 = vld [vmem:[#allocation3 + $0x120] sm:$0xff]
    %v68 = vld [vmem:[#allocation3 + $0x128] sm:$0xff]
    %v69 = vld [vmem:[#allocation3 + $0x130] sm:$0xff]
    %v70 = vld [vmem:[#allocation3 + $0x138] sm:$0xff]
    %v71 = vld [vmem:[#allocation3 + $0x140] sm:$0xff]
    %v72 = vld [vmem:[#allocation3 + $0x148] sm:$0xff]
    %v73 = vld [vmem:[#allocation3 + $0x150] sm:$0xff]
    %v74 = vld [vmem:[#allocation3 + $0x158] sm:$0xff]
    %v75 = vld [vmem:[#allocation3 + $0x160] sm:$0xff]
    %v76 = vld [vmem:[#allocation3 + $0x168] sm:$0xff]
    %v77 = vld [vmem:[#allocation3 + $0x170] sm:$0xff]
    %v78 = vld [vmem:[#allocation3 + $0x178] sm:$0xff]
    %v79 = vld [vmem:[#allocation3 + $0x180] sm:$0xff]
    %v80 = vld [vmem:[#allocation3 + $0x188] sm:$0xff]
    %v81 = vld [vmem:[#allocation3 + $0x190] sm:$0xff]
    %v82 = vld [vmem:[#allocation3 + $0x198] sm:$0xff]
    %v83 = vld [vmem:[#allocation3 + $0x1a0] sm:$0xff]
    %v84 = vld [vmem:[#allocation3 + $0x1a8] sm:$0xff]
    %v85 = vld [vmem:[#allocation3 + $0x1b0] sm:$0xff]
    %v86 = vld [vmem:[#allocation3 + $0x1b8] sm:$0xff]
    %v87 = vld [vmem:[#allocation3 + $0x1c0] sm:$0xff]
    %v88 = vld [vmem:[#allocation3 + $0x1c8] sm:$0xff]
    %v89 = vld [vmem:[#allocation3 + $0x1d0] sm:$0xff]
    %v90 = vld [vmem:[#allocation3 + $0x1d8] sm:$0xff]
    %v91 = vld [vmem:[#allocation3 + $0x1e0] sm:$0xff]
    %v92 = vld [vmem:[#allocation3 + $0x1e8] sm:$0xff]
    %v93 = vld [vmem:[#allocation3 + $0x1f0] sm:$0xff]
    %v94 = vld [vmem:[#allocation3 + $0x1f8] sm:$0xff]
    %s95 = sld [smem:[#allocation2]]
    %v96 = vstv %s95
    %97 = vmatprep.subr.mxu0 0.0
    %v98 = vand.u32 %v31, 4294901760
    %99 = vmatpush1.xpose.msra.mxu0 %v98
    %100 = vmatprep.subr.mxu0 0.0
    %v101 = vand.u32 %v32, 4294901760
    %102 = vmatpush1.xpose.msra.mxu0 %v101
    %103 = vmatprep.subr.mxu0 0.0
    %v104 = vand.u32 %v33, 4294901760
    %105 = vmatpush1.xpose.msra.mxu0 %v104
    %106 = vmatprep.subr.mxu0 0.0
    %v107 = vand.u32 %v34, 4294901760
    %108 = vmatpush1.xpose.msra.mxu0 %v107
    %109 = vmatprep.subr.mxu0 0.0
    %v110 = vand.u32 %v35, 4294901760
    %111 = vmatpush1.xpose.msra.mxu0 %v110
    %112 = vmatprep.subr.mxu0 0.0
    %v113 = vand.u32 %v36, 4294901760
    %114 = vmatpush1.xpose.msra.mxu0 %v113
    %115 = vmatprep.subr.mxu0 0.0
    %v116 = vand.u32 %v37, 4294901760
    %117 = vmatpush1.xpose.msra.mxu0 %v116
    %118 = vmatprep.subr.mxu0 0.0
    %v119 = vand.u32 %v38, 4294901760
    %120 = vmatpush1.xpose.msra.mxu0 %v119
    %121 = vmatprep.subr.mxu0 0.0
    %v122 = vand.u32 %v39, 4294901760
    %123 = vmatpush1.xpose.msra.mxu0 %v122
    %124 = vmatprep.subr.mxu0 0.0
    %v125 = vand.u32 %v40, 4294901760
    %126 = vmatpush1.xpose.msra.mxu0 %v125
    %127 = vmatprep.subr.mxu0 0.0
    %v128 = vand.u32 %v41, 4294901760
    %129 = vmatpush1.xpose.msra.mxu0 %v128
    %130 = vmatprep.subr.mxu0 0.0
    %v131 = vand.u32 %v42, 4294901760
    %132 = vmatpush1.xpose.msra.mxu0 %v131
    %133 = vmatprep.subr.mxu0 0.0
    %v134 = vand.u32 %v43, 4294901760
    %135 = vmatpush1.xpose.msra.mxu0 %v134
    %136 = vmatprep.subr.mxu0 0.0
    %v137 = vand.u32 %v44, 4294901760
    %138 = vmatpush1.xpose.msra.mxu0 %v137
    %139 = vmatprep.subr.mxu0 0.0
    %v140 = vand.u32 %v45, 4294901760
    %141 = vmatpush1.xpose.msra.mxu0 %v140
    %142 = vmatprep.subr.mxu0 0.0
    %v143 = vand.u32 %v46, 4294901760
    %144 = vmatpush1.xpose.msra.mxu0 %v143
    %145 = vmatprep.subr.mxu0 0.0
    %v146 = vand.u32 %v47, 4294901760
    %147 = vmatpush1.xpose.msra.mxu0 %v146
    %148 = vmatprep.subr.mxu0 0.0
    %v149 = vand.u32 %v48, 4294901760
    %150 = vmatpush1.xpose.msra.mxu0 %v149
    %151 = vmatprep.subr.mxu0 0.0
    %v152 = vand.u32 %v49, 4294901760
    %153 = vmatpush1.xpose.msra.mxu0 %v152
    %154 = vmatprep.subr.mxu0 0.0
    %v155 = vand.u32 %v50, 4294901760
    %156 = vmatpush1.xpose.msra.mxu0 %v155
    %157 = vmatprep.subr.mxu0 0.0
    %v158 = vand.u32 %v51, 4294901760
    %159 = vmatpush1.xpose.msra.mxu0 %v158
    %160 = vmatprep.subr.mxu0 0.0
    %v161 = vand.u32 %v52, 4294901760
    %162 = vmatpush1.xpose.msra.mxu0 %v161
    %163 = vmatprep.subr.mxu0 0.0
    %v164 = vand.u32 %v53, 4294901760
    %165 = vmatpush1.xpose.msra.mxu0 %v164
    %166 = vmatprep.subr.mxu0 0.0
    %v167 = vand.u32 %v54, 4294901760
    %168 = vmatpush1.xpose.msra.mxu0 %v167
    %169 = vmatprep.subr.mxu0 0.0
    %v170 = vand.u32 %v55, 4294901760
    %171 = vmatpush1.xpose.msra.mxu0 %v170
    %172 = vmatprep.subr.mxu0 0.0
    %v173 = vand.u32 %v56, 4294901760
    %174 = vmatpush1.xpose.msra.mxu0 %v173
    %175 = vmatprep.subr.mxu0 0.0
    %v176 = vand.u32 %v57, 4294901760
    %177 = vmatpush1.xpose.msra.mxu0 %v176
    %178 = vmatprep.subr.mxu0 0.0
    %v179 = vand.u32 %v58, 4294901760
    %180 = vmatpush1.xpose.msra.mxu0 %v179
    %181 = vmatprep.subr.mxu0 0.0
    %v182 = vand.u32 %v59, 4294901760
    %183 = vmatpush1.xpose.msra.mxu0 %v182
    %184 = vmatprep.subr.mxu0 0.0
    %v185 = vand.u32 %v60, 4294901760
    %186 = vmatpush1.xpose.msra.mxu0 %v185
    %187 = vmatprep.subr.mxu0 0.0
    %v188 = vand.u32 %v61, 4294901760
    %189 = vmatpush1.xpose.msra.mxu0 %v188
    %190 = vmatprep.subr.mxu0 0.0
    %v191 = vand.u32 %v62, 4294901760
    %192 = vmatpush1.xpose.msra.mxu0 %v191
    %193 = vmatprep.mubr.f32.mxu0 0.0
    %v194 = vand.u32 %v30, 4294901760
    %v195 = vsub.f32 %v30, %v194
    %v196 = vand.u32 %v195, 4294901760
    %v197 = vsub.f32 %v195, %v196
    %v198 = vand.u32 %v197, 4294901760
    %199 = vmatmul.mubr.f32.gmra.mrb[0].mxu0 %v198
    %v200 = vpop.f32.mrb[0].mxu0
    %v201 = vadd.f32 %v96, %v200
    %v202 = vpop.f32.mrb[0].mxu0
    %v203 = vadd.f32 %v96, %v202
    %204 = vdwg.mxu0
    %205 = vmatprep.subr.mxu0 0.0
    %v206 = vand.u32 %v31, 4294901760
    %v207 = vsub.f32 %v31, %v206
    %v208 = vand.u32 %v207, 4294901760
    %v209 = vsub.f32 %v207, %v208
    %v210 = vand.u32 %v209, 4294901760
    %211 = vmatpush1.xpose.msra.mxu0 %v210
    %212 = vmatprep.subr.mxu0 0.0
    %v213 = vand.u32 %v32, 4294901760
    %v214 = vsub.f32 %v32, %v213
    %v215 = vand.u32 %v214, 4294901760
    %v216 = vsub.f32 %v214, %v215
    %v217 = vand.u32 %v216, 4294901760
    %218 = vmatpush1.xpose.msra.mxu0 %v217
    %219 = vmatprep.subr.mxu0 0.0
    %v220 = vand.u32 %v33, 4294901760
    %v221 = vsub.f32 %v33, %v220
    %v222 = vand.u32 %v221, 4294901760
    %v223 = vsub.f32 %v221, %v222
    %v224 = vand.u32 %v223, 4294901760
    %225 = vmatpush1.xpose.msra.mxu0 %v224
    %226 = vmatprep.subr.mxu0 0.0
    %v227 = vand.u32 %v34, 4294901760
    %v228 = vsub.f32 %v34, %v227
    %v229 = vand.u32 %v228, 4294901760
    %v230 = vsub.f32 %v228, %v229
    %v231 = vand.u32 %v230, 4294901760
    %232 = vmatpush1.xpose.msra.mxu0 %v231
    %233 = vmatprep.subr.mxu0 0.0
    %v234 = vand.u32 %v35, 4294901760
    %v235 = vsub.f32 %v35, %v234
    %v236 = vand.u32 %v235, 4294901760
    %v237 = vsub.f32 %v235, %v236
    %v238 = vand.u32 %v237, 4294901760
    %239 = vmatpush1.xpose.msra.mxu0 %v238
    %240 = vmatprep.subr.mxu0 0.0
    %v241 = vand.u32 %v36, 4294901760
    %v242 = vsub.f32 %v36, %v241
    %v243 = vand.u32 %v242, 4294901760
    %v244 = vsub.f32 %v242, %v243
    %v245 = vand.u32 %v244, 4294901760
    %246 = vmatpush1.xpose.msra.mxu0 %v245
    %247 = vmatprep.subr.mxu0 0.0
    %v248 = vand.u32 %v37, 4294901760
    %v249 = vsub.f32 %v37, %v248
    %v250 = vand.u32 %v249, 4294901760
    %v251 = vsub.f32 %v249, %v250
    %v252 = vand.u32 %v251, 4294901760
    %253 = vmatpush1.xpose.msra.mxu0 %v252
    %254 = vmatprep.subr.mxu0 0.0
    %v255 = vand.u32 %v38, 4294901760
    %v256 = vsub.f32 %v38, %v255
    %v257 = vand.u32 %v256, 4294901760
    %v258 = vsub.f32 %v256, %v257
    %v259 = vand.u32 %v258, 4294901760
    %260 = vmatpush1.xpose.msra.mxu0 %v259
    %261 = vmatprep.subr.mxu0 0.0
    %v262 = vand.u32 %v39, 4294901760
    %v263 = vsub.f32 %v39, %v262
    %v264 = vand.u32 %v263, 4294901760
    %v265 = vsub.f32 %v263, %v264
    %v266 = vand.u32 %v265, 4294901760
    %267 = vmatpush1.xpose.msra.mxu0 %v266
    %268 = vmatprep.subr.mxu0 0.0
    %v269 = vand.u32 %v40, 4294901760
    %v270 = vsub.f32 %v40, %v269
    %v271 = vand.u32 %v270, 4294901760
    %v272 = vsub.f32 %v270, %v271
    %v273 = vand.u32 %v272, 4294901760
    %274 = vmatpush1.xpose.msra.mxu0 %v273
    %275 = vmatprep.subr.mxu0 0.0
    %v276 = vand.u32 %v41, 4294901760
    %v277 = vsub.f32 %v41, %v276
    %v278 = vand.u32 %v277, 4294901760
    %v279 = vsub.f32 %v277, %v278
    %v280 = vand.u32 %v279, 4294901760
    %281 = vmatpush1.xpose.msra.mxu0 %v280
    %282 = vmatprep.subr.mxu0 0.0
    %v283 = vand.u32 %v42, 4294901760
    %v284 = vsub.f32 %v42, %v283
    %v285 = vand.u32 %v284, 4294901760
    %v286 = vsub.f32 %v284, %v285
    %v287 = vand.u32 %v286, 4294901760
    %288 = vmatpush1.xpose.msra.mxu0 %v287
    %289 = vmatprep.subr.mxu0 0.0
    %v290 = vand.u32 %v43, 4294901760
    %v291 = vsub.f32 %v43, %v290
    %v292 = vand.u32 %v291, 4294901760
    %v293 = vsub.f32 %v291, %v292
    %v294 = vand.u32 %v293, 4294901760
    %295 = vmatpush1.xpose.msra.mxu0 %v294
    %296 = vmatprep.subr.mxu0 0.0
    %v297 = vand.u32 %v44, 4294901760
    %v298 = vsub.f32 %v44, %v297
    %v299 = vand.u32 %v298, 4294901760
    %v300 = vsub.f32 %v298, %v299
    %v301 = vand.u32 %v300, 4294901760
    %302 = vmatpush1.xpose.msra.mxu0 %v301
    %303 = vmatprep.subr.mxu0 0.0
    %v304 = vand.u32 %v45, 4294901760
    %v305 = vsub.f32 %v45, %v304
    %v306 = vand.u32 %v305, 4294901760
    %v307 = vsub.f32 %v305, %v306
    %v308 = vand.u32 %v307, 4294901760
    %309 = vmatpush1.xpose.msra.mxu0 %v308
    %310 = vmatprep.subr.mxu0 0.0
    %v311 = vand.u32 %v46, 4294901760
    %v312 = vsub.f32 %v46, %v311
    %v313 = vand.u32 %v312, 4294901760
    %v314 = vsub.f32 %v312, %v313
    %v315 = vand.u32 %v314, 4294901760
    %316 = vmatpush1.xpose.msra.mxu0 %v315
    %317 = vmatprep.subr.mxu0 0.0
    %v318 = vand.u32 %v47, 4294901760
    %v319 = vsub.f32 %v47, %v318
    %v320 = vand.u32 %v319, 4294901760
    %v321 = vsub.f32 %v319, %v320
    %v322 = vand.u32 %v321, 4294901760
    %323 = vmatpush1.xpose.msra.mxu0 %v322
    %324 = vmatprep.subr.mxu0 0.0
    %v325 = vand.u32 %v48, 4294901760
    %v326 = vsub.f32 %v48, %v325
    %v327 = vand.u32 %v326, 4294901760
    %v328 = vsub.f32 %v326, %v327
    %v329 = vand.u32 %v328, 4294901760
    %330 = vmatpush1.xpose.msra.mxu0 %v329
    %331 = vmatprep.subr.mxu0 0.0
    %v332 = vand.u32 %v49, 4294901760
    %v333 = vsub.f32 %v49, %v332
    %v334 = vand.u32 %v333, 4294901760
    %v335 = vsub.f32 %v333, %v334
    %v336 = vand.u32 %v335, 4294901760
    %337 = vmatpush1.xpose.msra.mxu0 %v336
    %338 = vmatprep.subr.mxu0 0.0
    %v339 = vand.u32 %v50, 4294901760
    %v340 = vsub.f32 %v50, %v339
    %v341 = vand.u32 %v340, 4294901760
    %v342 = vsub.f32 %v340, %v341
    %v343 = vand.u32 %v342, 4294901760
    %344 = vmatpush1.xpose.msra.mxu0 %v343
    %345 = vmatprep.subr.mxu0 0.0
    %v346 = vand.u32 %v51, 4294901760
    %v347 = vsub.f32 %v51, %v346
    %v348 = vand.u32 %v347, 4294901760
    %v349 = vsub.f32 %v347, %v348
    %v350 = vand.u32 %v349, 4294901760
    %351 = vmatpush1.xpose.msra.mxu0 %v350
    %352 = vmatprep.subr.mxu0 0.0
    %v353 = vand.u32 %v52, 4294901760
    %v354 = vsub.f32 %v52, %v353
    %v355 = vand.u32 %v354, 4294901760
    %v356 = vsub.f32 %v354, %v355
    %v357 = vand.u32 %v356, 4294901760
    %358 = vmatpush1.xpose.msra.mxu0 %v357
    %359 = vmatprep.subr.mxu0 0.0
    %v360 = vand.u32 %v53, 4294901760
    %v361 = vsub.f32 %v53, %v360
    %v362 = vand.u32 %v361, 4294901760
    %v363 = vsub.f32 %v361, %v362
    %v364 = vand.u32 %v363, 4294901760
    %365 = vmatpush1.xpose.msra.mxu0 %v364
    %366 = vmatprep.subr.mxu0 0.0
    %v367 = vand.u32 %v54, 4294901760
    %v368 = vsub.f32 %v54, %v367
    %v369 = vand.u32 %v368, 4294901760
    %v370 = vsub.f32 %v368, %v369
    %v371 = vand.u32 %v370, 4294901760
    %372 = vmatpush1.xpose.msra.mxu0 %v371
    %373 = vmatprep.subr.mxu0 0.0
    %v374 = vand.u32 %v55, 4294901760
    %v375 = vsub.f32 %v55, %v374
    %v376 = vand.u32 %v375, 4294901760
    %v377 = vsub.f32 %v375, %v376
    %v378 = vand.u32 %v377, 4294901760
    %379 = vmatpush1.xpose.msra.mxu0 %v378
    %380 = vmatprep.subr.mxu0 0.0
    %v381 = vand.u32 %v56, 4294901760
    %v382 = vsub.f32 %v56, %v381
    %v383 = vand.u32 %v382, 4294901760
    %v384 = vsub.f32 %v382, %v383
    %v385 = vand.u32 %v384, 4294901760
    %386 = vmatpush1.xpose.msra.mxu0 %v385
    %387 = vmatprep.subr.mxu0 0.0
    %v388 = vand.u32 %v57, 4294901760
    %v389 = vsub.f32 %v57, %v388
    %v390 = vand.u32 %v389, 4294901760
    %v391 = vsub.f32 %v389, %v390
    %v392 = vand.u32 %v391, 4294901760
    %393 = vmatpush1.xpose.msra.mxu0 %v392
    %394 = vmatprep.subr.mxu0 0.0
    %v395 = vand.u32 %v58, 4294901760
    %v396 = vsub.f32 %v58, %v395
    %v397 = vand.u32 %v396, 4294901760
    %v398 = vsub.f32 %v396, %v397
    %v399 = vand.u32 %v398, 4294901760
    %400 = vmatpush1.xpose.msra.mxu0 %v399
    %401 = vmatprep.subr.mxu0 0.0
    %v402 = vand.u32 %v59, 4294901760
    %v403 = vsub.f32 %v59, %v402
    %v404 = vand.u32 %v403, 4294901760
    %v405 = vsub.f32 %v403, %v404
    %v406 = vand.u32 %v405, 4294901760
    %407 = vmatpush1.xpose.msra.mxu0 %v406
    %408 = vmatprep.subr.mxu0 0.0
    %v409 = vand.u32 %v60, 4294901760
    %v410 = vsub.f32 %v60, %v409
    %v411 = vand.u32 %v410, 4294901760
    %v412 = vsub.f32 %v410, %v411
    %v413 = vand.u32 %v412, 4294901760
    %414 = vmatpush1.xpose.msra.mxu0 %v413
    %415 = vmatprep.subr.mxu0 0.0
    %v416 = vand.u32 %v61, 4294901760
    %v417 = vsub.f32 %v61, %v416
    %v418 = vand.u32 %v417, 4294901760
    %v419 = vsub.f32 %v417, %v418
    %v420 = vand.u32 %v419, 4294901760
    %421 = vmatpush1.xpose.msra.mxu0 %v420
    %422 = vmatprep.subr.mxu0 0.0
    %v423 = vand.u32 %v62, 4294901760
    %v424 = vsub.f32 %v62, %v423
    %v425 = vand.u32 %v424, 4294901760
    %v426 = vsub.f32 %v424, %v425
    %v427 = vand.u32 %v426, 4294901760
    %428 = vmatpush1.xpose.msra.mxu0 %v427
    %429 = vmatprep.mubr.f32.mxu0 0.0
    %v430 = vand.u32 %v30, 4294901760
    %431 = vmatmul.mubr.f32.gmra.mrb[0].mxu0 %v430
    %v432 = vpop.f32.mrb[0].mxu0
    %v433 = vadd.f32 %v201, %v432
    %v434 = vpop.f32.mrb[0].mxu0
    %v435 = vadd.f32 %v203, %v434
    %436 = vdwg.mxu0
    %437 = vmatprep.subr.mxu0 0.0
    %v438 = vand.u32 %v31, 4294901760
    %v439 = vsub.f32 %v31, %v438
    %440 = vmatpush1.xpose.msra.mxu0 %v439
    %441 = vmatprep.subr.mxu0 0.0
    %v442 = vand.u32 %v32, 4294901760
    %v443 = vsub.f32 %v32, %v442
    %444 = vmatpush1.xpose.msra.mxu0 %v443
    %445 = vmatprep.subr.mxu0 0.0
    %v446 = vand.u32 %v33, 4294901760
    %v447 = vsub.f32 %v33, %v446
    %448 = vmatpush1.xpose.msra.mxu0 %v447
    %449 = vmatprep.subr.mxu0 0.0
    %v450 = vand.u32 %v34, 4294901760
    %v451 = vsub.f32 %v34, %v450
    %452 = vmatpush1.xpose.msra.mxu0 %v451
    %453 = vmatprep.subr.mxu0 0.0
    %v454 = vand.u32 %v35, 4294901760
    %v455 = vsub.f32 %v35, %v454
    %456 = vmatpush1.xpose.msra.mxu0 %v455
    %457 = vmatprep.subr.mxu0 0.0
    %v458 = vand.u32 %v36, 4294901760
    %v459 = vsub.f32 %v36, %v458
    %460 = vmatpush1.xpose.msra.mxu0 %v459
    %461 = vmatprep.subr.mxu0 0.0
    %v462 = vand.u32 %v37, 4294901760
    %v463 = vsub.f32 %v37, %v462
    %464 = vmatpush1.xpose.msra.mxu0 %v463
    %465 = vmatprep.subr.mxu0 0.0
    %v466 = vand.u32 %v38, 4294901760
    %v467 = vsub.f32 %v38, %v466
    %468 = vmatpush1.xpose.msra.mxu0 %v467
    %469 = vmatprep.subr.mxu0 0.0
    %v470 = vand.u32 %v39, 4294901760
    %v471 = vsub.f32 %v39, %v470
    %472 = vmatpush1.xpose.msra.mxu0 %v471
    %473 = vmatprep.subr.mxu0 0.0
    %v474 = vand.u32 %v40, 4294901760
    %v475 = vsub.f32 %v40, %v474
    %476 = vmatpush1.xpose.msra.mxu0 %v475
    %477 = vmatprep.subr.mxu0 0.0
    %v478 = vand.u32 %v41, 4294901760
    %v479 = vsub.f32 %v41, %v478
    %480 = vmatpush1.xpose.msra.mxu0 %v479
    %481 = vmatprep.subr.mxu0 0.0
    %v482 = vand.u32 %v42, 4294901760
    %v483 = vsub.f32 %v42, %v482
    %484 = vmatpush1.xpose.msra.mxu0 %v483
    %485 = vmatprep.subr.mxu0 0.0
    %v486 = vand.u32 %v43, 4294901760
    %v487 = vsub.f32 %v43, %v486
    %488 = vmatpush1.xpose.msra.mxu0 %v487
    %489 = vmatprep.subr.mxu0 0.0
    %v490 = vand.u32 %v44, 4294901760
    %v491 = vsub.f32 %v44, %v490
    %492 = vmatpush1.xpose.msra.mxu0 %v491
    %493 = vmatprep.subr.mxu0 0.0
    %v494 = vand.u32 %v45, 4294901760
    %v495 = vsub.f32 %v45, %v494
    %496 = vmatpush1.xpose.msra.mxu0 %v495
    %497 = vmatprep.subr.mxu0 0.0
    %v498 = vand.u32 %v46, 4294901760
    %v499 = vsub.f32 %v46, %v498
    %500 = vmatpush1.xpose.msra.mxu0 %v499
    %501 = vmatprep.subr.mxu0 0.0
    %v502 = vand.u32 %v47, 4294901760
    %v503 = vsub.f32 %v47, %v502
    %504 = vmatpush1.xpose.msra.mxu0 %v503
    %505 = vmatprep.subr.mxu0 0.0
    %v506 = vand.u32 %v48, 4294901760
    %v507 = vsub.f32 %v48, %v506
    %508 = vmatpush1.xpose.msra.mxu0 %v507
    %509 = vmatprep.subr.mxu0 0.0
    %v510 = vand.u32 %v49, 4294901760
    %v511 = vsub.f32 %v49, %v510
    %512 = vmatpush1.xpose.msra.mxu0 %v511
    %513 = vmatprep.subr.mxu0 0.0
    %v514 = vand.u32 %v50, 4294901760
    %v515 = vsub.f32 %v50, %v514
    %516 = vmatpush1.xpose.msra.mxu0 %v515
    %517 = vmatprep.subr.mxu0 0.0
    %v518 = vand.u32 %v51, 4294901760
    %v519 = vsub.f32 %v51, %v518
    %520 = vmatpush1.xpose.msra.mxu0 %v519
    %521 = vmatprep.subr.mxu0 0.0
    %v522 = vand.u32 %v52, 4294901760
    %v523 = vsub.f32 %v52, %v522
    %524 = vmatpush1.xpose.msra.mxu0 %v523
    %525 = vmatprep.subr.mxu0 0.0
    %v526 = vand.u32 %v53, 4294901760
    %v527 = vsub.f32 %v53, %v526
    %528 = vmatpush1.xpose.msra.mxu0 %v527
    %529 = vmatprep.subr.mxu0 0.0
    %v530 = vand.u32 %v54, 4294901760
    %v531 = vsub.f32 %v54, %v530
    %532 = vmatpush1.xpose.msra.mxu0 %v531
    %533 = vmatprep.subr.mxu0 0.0
    %v534 = vand.u32 %v55, 4294901760
    %v535 = vsub.f32 %v55, %v534
    %536 = vmatpush1.xpose.msra.mxu0 %v535
    %537 = vmatprep.subr.mxu0 0.0
    %v538 = vand.u32 %v56, 4294901760
    %v539 = vsub.f32 %v56, %v538
    %540 = vmatpush1.xpose.msra.mxu0 %v539
    %541 = vmatprep.subr.mxu0 0.0
    %v542 = vand.u32 %v57, 4294901760
    %v543 = vsub.f32 %v57, %v542
    %544 = vmatpush1.xpose.msra.mxu0 %v543
    %545 = vmatprep.subr.mxu0 0.0
    %v546 = vand.u32 %v58, 4294901760
    %v547 = vsub.f32 %v58, %v546
    %548 = vmatpush1.xpose.msra.mxu0 %v547
    %549 = vmatprep.subr.mxu0 0.0
    %v550 = vand.u32 %v59, 4294901760
    %v551 = vsub.f32 %v59, %v550
    %552 = vmatpush1.xpose.msra.mxu0 %v551
    %553 = vmatprep.subr.mxu0 0.0
    %v554 = vand.u32 %v60, 4294901760
    %v555 = vsub.f32 %v60, %v554
    %556 = vmatpush1.xpose.msra.mxu0 %v555
    %557 = vmatprep.subr.mxu0 0.0
    %v558 = vand.u32 %v61, 4294901760
    %v559 = vsub.f32 %v61, %v558
    %560 = vmatpush1.xpose.msra.mxu0 %v559
    %561 = vmatprep.subr.mxu0 0.0
    %v562 = vand.u32 %v62, 4294901760
    %v563 = vsub.f32 %v62, %v562
    %564 = vmatpush1.xpose.msra.mxu0 %v563
    %565 = vmatprep.mubr.f32.mxu0 0.0
    %v566 = vand.u32 %v30, 4294901760
    %v567 = vsub.f32 %v30, %v566
    %568 = vmatmul.mubr.f32.gmra.mrb[0].mxu0 %v567
    %v569 = vpop.f32.mrb[0].mxu0
    %v570 = vadd.f32 %v433, %v569
    %v571 = vpop.f32.mrb[0].mxu0
    %v572 = vadd.f32 %v435, %v571
    %573 = vdwg.mxu0
    %574 = vmatprep.subr.mxu0 0.0
    %v575 = vand.u32 %v31, 4294901760
    %576 = vmatpush1.xpose.msra.mxu0 %v575
    %577 = vmatprep.subr.mxu0 0.0
    %v578 = vand.u32 %v32, 4294901760
    %579 = vmatpush1.xpose.msra.mxu0 %v578
    %580 = vmatprep.subr.mxu0 0.0
    %v581 = vand.u32 %v33, 4294901760
    %582 = vmatpush1.xpose.msra.mxu0 %v581
    %583 = vmatprep.subr.mxu0 0.0
    %v584 = vand.u32 %v34, 4294901760
    %585 = vmatpush1.xpose.msra.mxu0 %v584
    %586 = vmatprep.subr.mxu0 0.0
    %v587 = vand.u32 %v35, 4294901760
    %588 = vmatpush1.xpose.msra.mxu0 %v587
    %589 = vmatprep.subr.mxu0 0.0
    %v590 = vand.u32 %v36, 4294901760
    %591 = vmatpush1.xpose.msra.mxu0 %v590
    %592 = vmatprep.subr.mxu0 0.0
    %v593 = vand.u32 %v37, 4294901760
    %594 = vmatpush1.xpose.msra.mxu0 %v593
    %595 = vmatprep.subr.mxu0 0.0
    %v596 = vand.u32 %v38, 4294901760
    %597 = vmatpush1.xpose.msra.mxu0 %v596
    %598 = vmatprep.subr.mxu0 0.0
    %v599 = vand.u32 %v39, 4294901760
    %600 = vmatpush1.xpose.msra.mxu0 %v599
    %601 = vmatprep.subr.mxu0 0.0
    %v602 = vand.u32 %v40, 4294901760
    %603 = vmatpush1.xpose.msra.mxu0 %v602
    %604 = vmatprep.subr.mxu0 0.0
    %v605 = vand.u32 %v41, 4294901760
    %606 = vmatpush1.xpose.msra.mxu0 %v605
    %607 = vmatprep.subr.mxu0 0.0
    %v608 = vand.u32 %v42, 4294901760
    %609 = vmatpush1.xpose.msra.mxu0 %v608
    %610 = vmatprep.subr.mxu0 0.0
    %v611 = vand.u32 %v43, 4294901760
    %612 = vmatpush1.xpose.msra.mxu0 %v611
    %613 = vmatprep.subr.mxu0 0.0
    %v614 = vand.u32 %v44, 4294901760
    %615 = vmatpush1.xpose.msra.mxu0 %v614
    %616 = vmatprep.subr.mxu0 0.0
    %v617 = vand.u32 %v45, 4294901760
    %618 = vmatpush1.xpose.msra.mxu0 %v617
    %619 = vmatprep.subr.mxu0 0.0
    %v620 = vand.u32 %v46, 4294901760
    %621 = vmatpush1.xpose.msra.mxu0 %v620
    %622 = vmatprep.subr.mxu0 0.0
    %v623 = vand.u32 %v47, 4294901760
    %624 = vmatpush1.xpose.msra.mxu0 %v623
    %625 = vmatprep.subr.mxu0 0.0
    %v626 = vand.u32 %v48, 4294901760
    %627 = vmatpush1.xpose.msra.mxu0 %v626
    %628 = vmatprep.subr.mxu0 0.0
    %v629 = vand.u32 %v49, 4294901760
    %630 = vmatpush1.xpose.msra.mxu0 %v629
    %631 = vmatprep.subr.mxu0 0.0
    %v632 = vand.u32 %v50, 4294901760
    %633 = vmatpush1.xpose.msra.mxu0 %v632
    %634 = vmatprep.subr.mxu0 0.0
    %v635 = vand.u32 %v51, 4294901760
    %636 = vmatpush1.xpose.msra.mxu0 %v635
    %637 = vmatprep.subr.mxu0 0.0
    %v638 = vand.u32 %v52, 4294901760
    %639 = vmatpush1.xpose.msra.mxu0 %v638
    %640 = vmatprep.subr.mxu0 0.0
    %v641 = vand.u32 %v53, 4294901760
    %642 = vmatpush1.xpose.msra.mxu0 %v641
    %643 = vmatprep.subr.mxu0 0.0
    %v644 = vand.u32 %v54, 4294901760
    %645 = vmatpush1.xpose.msra.mxu0 %v644
    %646 = vmatprep.subr.mxu0 0.0
    %v647 = vand.u32 %v55, 4294901760
    %648 = vmatpush1.xpose.msra.mxu0 %v647
    %649 = vmatprep.subr.mxu0 0.0
    %v650 = vand.u32 %v56, 4294901760
    %651 = vmatpush1.xpose.msra.mxu0 %v650
    %652 = vmatprep.subr.mxu0 0.0
    %v653 = vand.u32 %v57, 4294901760
    %654 = vmatpush1.xpose.msra.mxu0 %v653
    %655 = vmatprep.subr.mxu0 0.0
    %v656 = vand.u32 %v58, 4294901760
    %657 = vmatpush1.xpose.msra.mxu0 %v656
    %658 = vmatprep.subr.mxu0 0.0
    %v659 = vand.u32 %v59, 4294901760
    %660 = vmatpush1.xpose.msra.mxu0 %v659
    %661 = vmatprep.subr.mxu0 0.0
    %v662 = vand.u32 %v60, 4294901760
    %663 = vmatpush1.xpose.msra.mxu0 %v662
    %664 = vmatprep.subr.mxu0 0.0
    %v665 = vand.u32 %v61, 4294901760
    %666 = vmatpush1.xpose.msra.mxu0 %v665
    %667 = vmatprep.subr.mxu0 0.0
    %v668 = vand.u32 %v62, 4294901760
    %669 = vmatpush1.xpose.msra.mxu0 %v668
    %670 = vmatprep.mubr.f32.mxu0 0.0
    %v671 = vand.u32 %v30, 4294901760
    %v672 = vsub.f32 %v30, %v671
    %v673 = vand.u32 %v672, 4294901760
    %674 = vmatmul.mubr.f32.gmra.mrb[0].mxu0 %v673
    %v675 = vpop.f32.mrb[0].mxu0
    %v676 = vadd.f32 %v570, %v675
    %v677 = vpop.f32.mrb[0].mxu0
    %v678 = vadd.f32 %v572, %v677
    %679 = vdwg.mxu0
    %680 = vmatprep.subr.mxu0 0.0
    %v681 = vand.u32 %v31, 4294901760
    %v682 = vsub.f32 %v31, %v681
    %v683 = vand.u32 %v682, 4294901760
    %684 = vmatpush1.xpose.msra.mxu0 %v683
    %685 = vmatprep.subr.mxu0 0.0
    %v686 = vand.u32 %v32, 4294901760
    %v687 = vsub.f32 %v32, %v686
    %v688 = vand.u32 %v687, 4294901760
    %689 = vmatpush1.xpose.msra.mxu0 %v688
    %690 = vmatprep.subr.mxu0 0.0
    %v691 = vand.u32 %v33, 4294901760
    %v692 = vsub.f32 %v33, %v691
    %v693 = vand.u32 %v692, 4294901760
    %694 = vmatpush1.xpose.msra.mxu0 %v693
    %695 = vmatprep.subr.mxu0 0.0
    %v696 = vand.u32 %v34, 4294901760
    %v697 = vsub.f32 %v34, %v696
    %v698 = vand.u32 %v697, 4294901760
    %699 = vmatpush1.xpose.msra.mxu0 %v698
    %700 = vmatprep.subr.mxu0 0.0
    %v701 = vand.u32 %v35, 4294901760
    %v702 = vsub.f32 %v35, %v701
    %v703 = vand.u32 %v702, 4294901760
    %704 = vmatpush1.xpose.msra.mxu0 %v703
    %705 = vmatprep.subr.mxu0 0.0
    %v706 = vand.u32 %v36, 4294901760
    %v707 = vsub.f32 %v36, %v706
    %v708 = vand.u32 %v707, 4294901760
    %709 = vmatpush1.xpose.msra.mxu0 %v708
    %710 = vmatprep.subr.mxu0 0.0
    %v711 = vand.u32 %v37, 4294901760
    %v712 = vsub.f32 %v37, %v711
    %v713 = vand.u32 %v712, 4294901760
    %714 = vmatpush1.xpose.msra.mxu0 %v713
    %715 = vmatprep.subr.mxu0 0.0
    %v716 = vand.u32 %v38, 4294901760
    %v717 = vsub.f32 %v38, %v716
    %v718 = vand.u32 %v717, 4294901760
    %719 = vmatpush1.xpose.msra.mxu0 %v718
    %720 = vmatprep.subr.mxu0 0.0
    %v721 = vand.u32 %v39, 4294901760
    %v722 = vsub.f32 %v39, %v721
    %v723 = vand.u32 %v722, 4294901760
    %724 = vmatpush1.xpose.msra.mxu0 %v723
    %725 = vmatprep.subr.mxu0 0.0
    %v726 = vand.u32 %v40, 4294901760
    %v727 = vsub.f32 %v40, %v726
    %v728 = vand.u32 %v727, 4294901760
    %729 = vmatpush1.xpose.msra.mxu0 %v728
    %730 = vmatprep.subr.mxu0 0.0
    %v731 = vand.u32 %v41, 4294901760
    %v732 = vsub.f32 %v41, %v731
    %v733 = vand.u32 %v732, 4294901760
    %734 = vmatpush1.xpose.msra.mxu0 %v733
    %735 = vmatprep.subr.mxu0 0.0
    %v736 = vand.u32 %v42, 4294901760
    %v737 = vsub.f32 %v42, %v736
    %v738 = vand.u32 %v737, 4294901760
    %739 = vmatpush1.xpose.msra.mxu0 %v738
    %740 = vmatprep.subr.mxu0 0.0
    %v741 = vand.u32 %v43, 4294901760
    %v742 = vsub.f32 %v43, %v741
    %v743 = vand.u32 %v742, 4294901760
    %744 = vmatpush1.xpose.msra.mxu0 %v743
    %745 = vmatprep.subr.mxu0 0.0
    %v746 = vand.u32 %v44, 4294901760
    %v747 = vsub.f32 %v44, %v746
    %v748 = vand.u32 %v747, 4294901760
    %749 = vmatpush1.xpose.msra.mxu0 %v748
    %750 = vmatprep.subr.mxu0 0.0
    %v751 = vand.u32 %v45, 4294901760
    %v752 = vsub.f32 %v45, %v751
    %v753 = vand.u32 %v752, 4294901760
    %754 = vmatpush1.xpose.msra.mxu0 %v753
    %755 = vmatprep.subr.mxu0 0.0
    %v756 = vand.u32 %v46, 4294901760
    %v757 = vsub.f32 %v46, %v756
    %v758 = vand.u32 %v757, 4294901760
    %759 = vmatpush1.xpose.msra.mxu0 %v758
    %760 = vmatprep.subr.mxu0 0.0
    %v761 = vand.u32 %v47, 4294901760
    %v762 = vsub.f32 %v47, %v761
    %v763 = vand.u32 %v762, 4294901760
    %764 = vmatpush1.xpose.msra.mxu0 %v763
    %765 = vmatprep.subr.mxu0 0.0
    %v766 = vand.u32 %v48, 4294901760
    %v767 = vsub.f32 %v48, %v766
    %v768 = vand.u32 %v767, 4294901760
    %769 = vmatpush1.xpose.msra.mxu0 %v768
    %770 = vmatprep.subr.mxu0 0.0
    %v771 = vand.u32 %v49, 4294901760
    %v772 = vsub.f32 %v49, %v771
    %v773 = vand.u32 %v772, 4294901760
    %774 = vmatpush1.xpose.msra.mxu0 %v773
    %775 = vmatprep.subr.mxu0 0.0
    %v776 = vand.u32 %v50, 4294901760
    %v777 = vsub.f32 %v50, %v776
    %v778 = vand.u32 %v777, 4294901760
    %779 = vmatpush1.xpose.msra.mxu0 %v778
    %780 = vmatprep.subr.mxu0 0.0
    %v781 = vand.u32 %v51, 4294901760
    %v782 = vsub.f32 %v51, %v781
    %v783 = vand.u32 %v782, 4294901760
    %784 = vmatpush1.xpose.msra.mxu0 %v783
    %785 = vmatprep.subr.mxu0 0.0
    %v786 = vand.u32 %v52, 4294901760
    %v787 = vsub.f32 %v52, %v786
    %v788 = vand.u32 %v787, 4294901760
    %789 = vmatpush1.xpose.msra.mxu0 %v788
    %790 = vmatprep.subr.mxu0 0.0
    %v791 = vand.u32 %v53, 4294901760
    %v792 = vsub.f32 %v53, %v791
    %v793 = vand.u32 %v792, 4294901760
    %794 = vmatpush1.xpose.msra.mxu0 %v793
    %795 = vmatprep.subr.mxu0 0.0
    %v796 = vand.u32 %v54, 4294901760
    %v797 = vsub.f32 %v54, %v796
    %v798 = vand.u32 %v797, 4294901760
    %799 = vmatpush1.xpose.msra.mxu0 %v798
    %800 = vmatprep.subr.mxu0 0.0
    %v801 = vand.u32 %v55, 4294901760
    %v802 = vsub.f32 %v55, %v801
    %v803 = vand.u32 %v802, 4294901760
    %804 = vmatpush1.xpose.msra.mxu0 %v803
    %805 = vmatprep.subr.mxu0 0.0
    %v806 = vand.u32 %v56, 4294901760
    %v807 = vsub.f32 %v56, %v806
    %v808 = vand.u32 %v807, 4294901760
    %809 = vmatpush1.xpose.msra.mxu0 %v808
    %810 = vmatprep.subr.mxu0 0.0
    %v811 = vand.u32 %v57, 4294901760
    %v812 = vsub.f32 %v57, %v811
    %v813 = vand.u32 %v812, 4294901760
    %814 = vmatpush1.xpose.msra.mxu0 %v813
    %815 = vmatprep.subr.mxu0 0.0
    %v816 = vand.u32 %v58, 4294901760
    %v817 = vsub.f32 %v58, %v816
    %v818 = vand.u32 %v817, 4294901760
    %819 = vmatpush1.xpose.msra.mxu0 %v818
    %820 = vmatprep.subr.mxu0 0.0
    %v821 = vand.u32 %v59, 4294901760
    %v822 = vsub.f32 %v59, %v821
    %v823 = vand.u32 %v822, 4294901760
    %824 = vmatpush1.xpose.msra.mxu0 %v823
    %825 = vmatprep.subr.mxu0 0.0
    %v826 = vand.u32 %v60, 4294901760
    %v827 = vsub.f32 %v60, %v826
    %v828 = vand.u32 %v827, 4294901760
    %829 = vmatpush1.xpose.msra.mxu0 %v828
    %830 = vmatprep.subr.mxu0 0.0
    %v831 = vand.u32 %v61, 4294901760
    %v832 = vsub.f32 %v61, %v831
    %v833 = vand.u32 %v832, 4294901760
    %834 = vmatpush1.xpose.msra.mxu0 %v833
    %835 = vmatprep.subr.mxu0 0.0
    %v836 = vand.u32 %v62, 4294901760
    %v837 = vsub.f32 %v62, %v836
    %v838 = vand.u32 %v837, 4294901760
    %839 = vmatpush1.xpose.msra.mxu0 %v838
    %840 = vmatprep.mubr.f32.mxu0 0.0
    %v841 = vand.u32 %v30, 4294901760
    %842 = vmatmul.mubr.f32.gmra.mrb[0].mxu0 %v841
    %v843 = vpop.f32.mrb[0].mxu0
    %v844 = vadd.f32 %v676, %v843
    %v845 = vpop.f32.mrb[0].mxu0
    %v846 = vadd.f32 %v678, %v845
    %847 = vdwg.mxu0
    %848 = vmatprep.subr.mxu0 0.0
    %v849 = vand.u32 %v31, 4294901760
    %850 = vmatpush1.xpose.msra.mxu0 %v849
    %851 = vmatprep.subr.mxu0 0.0
    %v852 = vand.u32 %v32, 4294901760
    %853 = vmatpush1.xpose.msra.mxu0 %v852
    %854 = vmatprep.subr.mxu0 0.0
    %v855 = vand.u32 %v33, 4294901760
    %856 = vmatpush1.xpose.msra.mxu0 %v855
    %857 = vmatprep.subr.mxu0 0.0
    %v858 = vand.u32 %v34, 4294901760
    %859 = vmatpush1.xpose.msra.mxu0 %v858
    %860 = vmatprep.subr.mxu0 0.0
    %v861 = vand.u32 %v35, 4294901760
    %862 = vmatpush1.xpose.msra.mxu0 %v861
    %863 = vmatprep.subr.mxu0 0.0
    %v864 = vand.u32 %v36, 4294901760
    %865 = vmatpush1.xpose.msra.mxu0 %v864
    %866 = vmatprep.subr.mxu0 0.0
    %v867 = vand.u32 %v37, 4294901760
    %868 = vmatpush1.xpose.msra.mxu0 %v867
    %869 = vmatprep.subr.mxu0 0.0
    %v870 = vand.u32 %v38, 4294901760
    %871 = vmatpush1.xpose.msra.mxu0 %v870
    %872 = vmatprep.subr.mxu0 0.0
    %v873 = vand.u32 %v39, 4294901760
    %874 = vmatpush1.xpose.msra.mxu0 %v873
    %875 = vmatprep.subr.mxu0 0.0
    %v876 = vand.u32 %v40, 4294901760
    %877 = vmatpush1.xpose.msra.mxu0 %v876
    %878 = vmatprep.subr.mxu0 0.0
    %v879 = vand.u32 %v41, 4294901760
    %880 = vmatpush1.xpose.msra.mxu0 %v879
    %881 = vmatprep.subr.mxu0 0.0
    %v882 = vand.u32 %v42, 4294901760
    %883 = vmatpush1.xpose.msra.mxu0 %v882
    %884 = vmatprep.subr.mxu0 0.0
    %v885 = vand.u32 %v43, 4294901760
    %886 = vmatpush1.xpose.msra.mxu0 %v885
    %887 = vmatprep.subr.mxu0 0.0
    %v888 = vand.u32 %v44, 4294901760
    %889 = vmatpush1.xpose.msra.mxu0 %v888
    %890 = vmatprep.subr.mxu0 0.0
    %v891 = vand.u32 %v45, 4294901760
    %892 = vmatpush1.xpose.msra.mxu0 %v891
    %893 = vmatprep.subr.mxu0 0.0
    %v894 = vand.u32 %v46, 4294901760
    %895 = vmatpush1.xpose.msra.mxu0 %v894
    %896 = vmatprep.subr.mxu0 0.0
    %v897 = vand.u32 %v47, 4294901760
    %898 = vmatpush1.xpose.msra.mxu0 %v897
    %899 = vmatprep.subr.mxu0 0.0
    %v900 = vand.u32 %v48, 4294901760
    %901 = vmatpush1.xpose.msra.mxu0 %v900
    %902 = vmatprep.subr.mxu0 0.0
    %v903 = vand.u32 %v49, 4294901760
    %904 = vmatpush1.xpose.msra.mxu0 %v903
    %905 = vmatprep.subr.mxu0 0.0
    %v906 = vand.u32 %v50, 4294901760
    %907 = vmatpush1.xpose.msra.mxu0 %v906
    %908 = vmatprep.subr.mxu0 0.0
    %v909 = vand.u32 %v51, 4294901760
    %910 = vmatpush1.xpose.msra.mxu0 %v909
    %911 = vmatprep.subr.mxu0 0.0
    %v912 = vand.u32 %v52, 4294901760
    %913 = vmatpush1.xpose.msra.mxu0 %v912
    %914 = vmatprep.subr.mxu0 0.0
    %v915 = vand.u32 %v53, 4294901760
    %916 = vmatpush1.xpose.msra.mxu0 %v915
    %917 = vmatprep.subr.mxu0 0.0
    %v918 = vand.u32 %v54, 4294901760
    %919 = vmatpush1.xpose.msra.mxu0 %v918
    %920 = vmatprep.subr.mxu0 0.0
    %v921 = vand.u32 %v55, 4294901760
    %922 = vmatpush1.xpose.msra.mxu0 %v921
    %923 = vmatprep.subr.mxu0 0.0
    %v924 = vand.u32 %v56, 4294901760
    %925 = vmatpush1.xpose.msra.mxu0 %v924
    %926 = vmatprep.subr.mxu0 0.0
    %v927 = vand.u32 %v57, 4294901760
    %928 = vmatpush1.xpose.msra.mxu0 %v927
    %929 = vmatprep.subr.mxu0 0.0
    %v930 = vand.u32 %v58, 4294901760
    %931 = vmatpush1.xpose.msra.mxu0 %v930
    %932 = vmatprep.subr.mxu0 0.0
    %v933 = vand.u32 %v59, 4294901760
    %934 = vmatpush1.xpose.msra.mxu0 %v933
    %935 = vmatprep.subr.mxu0 0.0
    %v936 = vand.u32 %v60, 4294901760
    %937 = vmatpush1.xpose.msra.mxu0 %v936
    %938 = vmatprep.subr.mxu0 0.0
    %v939 = vand.u32 %v61, 4294901760
    %940 = vmatpush1.xpose.msra.mxu0 %v939
    %941 = vmatprep.subr.mxu0 0.0
    %v942 = vand.u32 %v62, 4294901760
    %943 = vmatpush1.xpose.msra.mxu0 %v942
    %944 = vmatprep.mubr.f32.mxu0 0.0
    %v945 = vand.u32 %v30, 4294901760
    %946 = vmatmul.mubr.f32.gmra.mrb[0].mxu0 %v945
    %v947 = vpop.f32.mrb[0].mxu0
    %v948 = vadd.f32 %v844, %v947
    %v949 = vpop.f32.mrb[0].mxu0
    %v950 = vadd.f32 %v846, %v949
    %951 = vdwg.mxu0
    %952 = vmatprep.subr.mxu0 0.0
    %v953 = vand.u32 %v63, 4294901760
    %954 = vmatpush1.xpose.msra.mxu0 %v953
    %955 = vmatprep.subr.mxu0 0.0
    %v956 = vand.u32 %v64, 4294901760
    %957 = vmatpush1.xpose.msra.mxu0 %v956
    %958 = vmatprep.subr.mxu0 0.0
    %v959 = vand.u32 %v65, 4294901760
    %960 = vmatpush1.xpose.msra.mxu0 %v959
    %961 = vmatprep.subr.mxu0 0.0
    %v962 = vand.u32 %v66, 4294901760
    %963 = vmatpush1.xpose.msra.mxu0 %v962
    %964 = vmatprep.subr.mxu0 0.0
    %v965 = vand.u32 %v67, 4294901760
    %966 = vmatpush1.xpose.msra.mxu0 %v965
    %967 = vmatprep.subr.mxu0 0.0
    %v968 = vand.u32 %v68, 4294901760
    %969 = vmatpush1.xpose.msra.mxu0 %v968
    %970 = vmatprep.subr.mxu0 0.0
    %v971 = vand.u32 %v69, 4294901760
    %972 = vmatpush1.xpose.msra.mxu0 %v971
    %973 = vmatprep.subr.mxu0 0.0
    %v974 = vand.u32 %v70, 4294901760
    %975 = vmatpush1.xpose.msra.mxu0 %v974
    %976 = vmatprep.subr.mxu0 0.0
    %v977 = vand.u32 %v71, 4294901760
    %978 = vmatpush1.xpose.msra.mxu0 %v977
    %979 = vmatprep.subr.mxu0 0.0
    %v980 = vand.u32 %v72, 4294901760
    %981 = vmatpush1.xpose.msra.mxu0 %v980
    %982 = vmatprep.subr.mxu0 0.0
    %v983 = vand.u32 %v73, 4294901760
    %984 = vmatpush1.xpose.msra.mxu0 %v983
    %985 = vmatprep.subr.mxu0 0.0
    %v986 = vand.u32 %v74, 4294901760
    %987 = vmatpush1.xpose.msra.mxu0 %v986
    %988 = vmatprep.subr.mxu0 0.0
    %v989 = vand.u32 %v75, 4294901760
    %990 = vmatpush1.xpose.msra.mxu0 %v989
    %991 = vmatprep.subr.mxu0 0.0
    %v992 = vand.u32 %v76, 4294901760
    %993 = vmatpush1.xpose.msra.mxu0 %v992
    %994 = vmatprep.subr.mxu0 0.0
    %v995 = vand.u32 %v77, 4294901760
    %996 = vmatpush1.xpose.msra.mxu0 %v995
    %997 = vmatprep.subr.mxu0 0.0
    %v998 = vand.u32 %v78, 4294901760
    %999 = vmatpush1.xpose.msra.mxu0 %v998
    %1000 = vmatprep.subr.mxu0 0.0
    %v1001 = vand.u32 %v79, 4294901760
    %1002 = vmatpush1.xpose.msra.mxu0 %v1001
    %1003 = vmatprep.subr.mxu0 0.0
    %v1004 = vand.u32 %v80, 4294901760
    %1005 = vmatpush1.xpose.msra.mxu0 %v1004
    %1006 = vmatprep.subr.mxu0 0.0
    %v1007 = vand.u32 %v81, 4294901760
    %1008 = vmatpush1.xpose.msra.mxu0 %v1007
    %1009 = vmatprep.subr.mxu0 0.0
    %v1010 = vand.u32 %v82, 4294901760
    %1011 = vmatpush1.xpose.msra.mxu0 %v1010
    %1012 = vmatprep.subr.mxu0 0.0
    %v1013 = vand.u32 %v83, 4294901760
    %1014 = vmatpush1.xpose.msra.mxu0 %v1013
    %1015 = vmatprep.subr.mxu0 0.0
    %v1016 = vand.u32 %v84, 4294901760
    %1017 = vmatpush1.xpose.msra.mxu0 %v1016
    %1018 = vmatprep.subr.mxu0 0.0
    %v1019 = vand.u32 %v85, 4294901760
    %1020 = vmatpush1.xpose.msra.mxu0 %v1019
    %1021 = vmatprep.subr.mxu0 0.0
    %v1022 = vand.u32 %v86, 4294901760
    %1023 = vmatpush1.xpose.msra.mxu0 %v1022
    %1024 = vmatprep.subr.mxu0 0.0
    %v1025 = vand.u32 %v87, 4294901760
    %1026 = vmatpush1.xpose.msra.mxu0 %v1025
    %1027 = vmatprep.subr.mxu0 0.0
    %v1028 = vand.u32 %v88, 4294901760
    %1029 = vmatpush1.xpose.msra.mxu0 %v1028
    %1030 = vmatprep.subr.mxu0 0.0
    %v1031 = vand.u32 %v89, 4294901760
    %1032 = vmatpush1.xpose.msra.mxu0 %v1031
    %1033 = vmatprep.subr.mxu0 0.0
    %v1034 = vand.u32 %v90, 4294901760
    %1035 = vmatpush1.xpose.msra.mxu0 %v1034
    %1036 = vmatprep.subr.mxu0 0.0
    %v1037 = vand.u32 %v91, 4294901760
    %1038 = vmatpush1.xpose.msra.mxu0 %v1037
    %1039 = vmatprep.subr.mxu0 0.0
    %v1040 = vand.u32 %v92, 4294901760
    %1041 = vmatpush1.xpose.msra.mxu0 %v1040
    %1042 = vmatprep.subr.mxu0 0.0
    %v1043 = vand.u32 %v93, 4294901760
    %1044 = vmatpush1.xpose.msra.mxu0 %v1043
    %1045 = vmatprep.subr.mxu0 0.0
    %v1046 = vand.u32 %v94, 4294901760
    %1047 = vmatpush1.xpose.msra.mxu0 %v1046
    %1048 = vmatprep.mubr.f32.mxu0 0.0
    %v1049 = vand.u32 %v30, 4294901760
    %v1050 = vsub.f32 %v30, %v1049
    %v1051 = vand.u32 %v1050, 4294901760
    %v1052 = vsub.f32 %v1050, %v1051
    %v1053 = vand.u32 %v1052, 4294901760
    %1054 = vmatmul.mubr.f32.gmra.mrb[0].mxu0 %v1053
    %v1055 = vpop.f32.mrb[0].mxu0
    %v1056 = vadd.f32 %v96, %v1055
    %v1057 = vpop.f32.mrb[0].mxu0
    %v1058 = vadd.f32 %v96, %v1057
    %1059 = vdwg.mxu0
    %1060 = vmatprep.subr.mxu0 0.0
    %v1061 = vand.u32 %v63, 4294901760
    %v1062 = vsub.f32 %v63, %v1061
    %v1063 = vand.u32 %v1062, 4294901760
    %v1064 = vsub.f32 %v1062, %v1063
    %v1065 = vand.u32 %v1064, 4294901760
    %1066 = vmatpush1.xpose.msra.mxu0 %v1065
    %1067 = vmatprep.subr.mxu0 0.0
    %v1068 = vand.u32 %v64, 4294901760
    %v1069 = vsub.f32 %v64, %v1068
    %v1070 = vand.u32 %v1069, 4294901760
    %v1071 = vsub.f32 %v1069, %v1070
    %v1072 = vand.u32 %v1071, 4294901760
    %1073 = vmatpush1.xpose.msra.mxu0 %v1072
    %1074 = vmatprep.subr.mxu0 0.0
    %v1075 = vand.u32 %v65, 4294901760
    %v1076 = vsub.f32 %v65, %v1075
    %v1077 = vand.u32 %v1076, 4294901760
    %v1078 = vsub.f32 %v1076, %v1077
    %v1079 = vand.u32 %v1078, 4294901760
    %1080 = vmatpush1.xpose.msra.mxu0 %v1079
    %1081 = vmatprep.subr.mxu0 0.0
    %v1082 = vand.u32 %v66, 4294901760
    %v1083 = vsub.f32 %v66, %v1082
    %v1084 = vand.u32 %v1083, 4294901760
    %v1085 = vsub.f32 %v1083, %v1084
    %v1086 = vand.u32 %v1085, 4294901760
    %1087 = vmatpush1.xpose.msra.mxu0 %v1086
    %1088 = vmatprep.subr.mxu0 0.0
    %v1089 = vand.u32 %v67, 4294901760
    %v1090 = vsub.f32 %v67, %v1089
    %v1091 = vand.u32 %v1090, 4294901760
    %v1092 = vsub.f32 %v1090, %v1091
    %v1093 = vand.u32 %v1092, 4294901760
    %1094 = vmatpush1.xpose.msra.mxu0 %v1093
    %1095 = vmatprep.subr.mxu0 0.0
    %v1096 = vand.u32 %v68, 4294901760
    %v1097 = vsub.f32 %v68, %v1096
    %v1098 = vand.u32 %v1097, 4294901760
    %v1099 = vsub.f32 %v1097, %v1098
    %v1100 = vand.u32 %v1099, 4294901760
    %1101 = vmatpush1.xpose.msra.mxu0 %v1100
    %1102 = vmatprep.subr.mxu0 0.0
    %v1103 = vand.u32 %v69, 4294901760
    %v1104 = vsub.f32 %v69, %v1103
    %v1105 = vand.u32 %v1104, 4294901760
    %v1106 = vsub.f32 %v1104, %v1105
    %v1107 = vand.u32 %v1106, 4294901760
    %1108 = vmatpush1.xpose.msra.mxu0 %v1107
    %1109 = vmatprep.subr.mxu0 0.0
    %v1110 = vand.u32 %v70, 4294901760
    %v1111 = vsub.f32 %v70, %v1110
    %v1112 = vand.u32 %v1111, 4294901760
    %v1113 = vsub.f32 %v1111, %v1112
    %v1114 = vand.u32 %v1113, 4294901760
    %1115 = vmatpush1.xpose.msra.mxu0 %v1114
    %1116 = vmatprep.subr.mxu0 0.0
    %v1117 = vand.u32 %v71, 4294901760
    %v1118 = vsub.f32 %v71, %v1117
    %v1119 = vand.u32 %v1118, 4294901760
    %v1120 = vsub.f32 %v1118, %v1119
    %v1121 = vand.u32 %v1120, 4294901760
    %1122 = vmatpush1.xpose.msra.mxu0 %v1121
    %1123 = vmatprep.subr.mxu0 0.0
    %v1124 = vand.u32 %v72, 4294901760
    %v1125 = vsub.f32 %v72, %v1124
    %v1126 = vand.u32 %v1125, 4294901760
    %v1127 = vsub.f32 %v1125, %v1126
    %v1128 = vand.u32 %v1127, 4294901760
    %1129 = vmatpush1.xpose.msra.mxu0 %v1128
    %1130 = vmatprep.subr.mxu0 0.0
    %v1131 = vand.u32 %v73, 4294901760
    %v1132 = vsub.f32 %v73, %v1131
    %v1133 = vand.u32 %v1132, 4294901760
    %v1134 = vsub.f32 %v1132, %v1133
    %v1135 = vand.u32 %v1134, 4294901760
    %1136 = vmatpush1.xpose.msra.mxu0 %v1135
    %1137 = vmatprep.subr.mxu0 0.0
    %v1138 = vand.u32 %v74, 4294901760
    %v1139 = vsub.f32 %v74, %v1138
    %v1140 = vand.u32 %v1139, 4294901760
    %v1141 = vsub.f32 %v1139, %v1140
    %v1142 = vand.u32 %v1141, 4294901760
    %1143 = vmatpush1.xpose.msra.mxu0 %v1142
    %1144 = vmatprep.subr.mxu0 0.0
    %v1145 = vand.u32 %v75, 4294901760
    %v1146 = vsub.f32 %v75, %v1145
    %v1147 = vand.u32 %v1146, 4294901760
    %v1148 = vsub.f32 %v1146, %v1147
    %v1149 = vand.u32 %v1148, 4294901760
    %1150 = vmatpush1.xpose.msra.mxu0 %v1149
    %1151 = vmatprep.subr.mxu0 0.0
    %v1152 = vand.u32 %v76, 4294901760
    %v1153 = vsub.f32 %v76, %v1152
    %v1154 = vand.u32 %v1153, 4294901760
    %v1155 = vsub.f32 %v1153, %v1154
    %v1156 = vand.u32 %v1155, 4294901760
    %1157 = vmatpush1.xpose.msra.mxu0 %v1156
    %1158 = vmatprep.subr.mxu0 0.0
    %v1159 = vand.u32 %v77, 4294901760
    %v1160 = vsub.f32 %v77, %v1159
    %v1161 = vand.u32 %v1160, 4294901760
    %v1162 = vsub.f32 %v1160, %v1161
    %v1163 = vand.u32 %v1162, 4294901760
    %1164 = vmatpush1.xpose.msra.mxu0 %v1163
    %1165 = vmatprep.subr.mxu0 0.0
    %v1166 = vand.u32 %v78, 4294901760
    %v1167 = vsub.f32 %v78, %v1166
    %v1168 = vand.u32 %v1167, 4294901760
    %v1169 = vsub.f32 %v1167, %v1168
    %v1170 = vand.u32 %v1169, 4294901760
    %1171 = vmatpush1.xpose.msra.mxu0 %v1170
    %1172 = vmatprep.subr.mxu0 0.0
    %v1173 = vand.u32 %v79, 4294901760
    %v1174 = vsub.f32 %v79, %v1173
    %v1175 = vand.u32 %v1174, 4294901760
    %v1176 = vsub.f32 %v1174, %v1175
    %v1177 = vand.u32 %v1176, 4294901760
    %1178 = vmatpush1.xpose.msra.mxu0 %v1177
    %1179 = vmatprep.subr.mxu0 0.0
    %v1180 = vand.u32 %v80, 4294901760
    %v1181 = vsub.f32 %v80, %v1180
    %v1182 = vand.u32 %v1181, 4294901760
    %v1183 = vsub.f32 %v1181, %v1182
    %v1184 = vand.u32 %v1183, 4294901760
    %1185 = vmatpush1.xpose.msra.mxu0 %v1184
    %1186 = vmatprep.subr.mxu0 0.0
    %v1187 = vand.u32 %v81, 4294901760
    %v1188 = vsub.f32 %v81, %v1187
    %v1189 = vand.u32 %v1188, 4294901760
    %v1190 = vsub.f32 %v1188, %v1189
    %v1191 = vand.u32 %v1190, 4294901760
    %1192 = vmatpush1.xpose.msra.mxu0 %v1191
    %1193 = vmatprep.subr.mxu0 0.0
    %v1194 = vand.u32 %v82, 4294901760
    %v1195 = vsub.f32 %v82, %v1194
    %v1196 = vand.u32 %v1195, 4294901760
    %v1197 = vsub.f32 %v1195, %v1196
    %v1198 = vand.u32 %v1197, 4294901760
    %1199 = vmatpush1.xpose.msra.mxu0 %v1198
    %1200 = vmatprep.subr.mxu0 0.0
    %v1201 = vand.u32 %v83, 4294901760
    %v1202 = vsub.f32 %v83, %v1201
    %v1203 = vand.u32 %v1202, 4294901760
    %v1204 = vsub.f32 %v1202, %v1203
    %v1205 = vand.u32 %v1204, 4294901760
    %1206 = vmatpush1.xpose.msra.mxu0 %v1205
    %1207 = vmatprep.subr.mxu0 0.0
    %v1208 = vand.u32 %v84, 4294901760
    %v1209 = vsub.f32 %v84, %v1208
    %v1210 = vand.u32 %v1209, 4294901760
    %v1211 = vsub.f32 %v1209, %v1210
    %v1212 = vand.u32 %v1211, 4294901760
    %1213 = vmatpush1.xpose.msra.mxu0 %v1212
    %1214 = vmatprep.subr.mxu0 0.0
    %v1215 = vand.u32 %v85, 4294901760
    %v1216 = vsub.f32 %v85, %v1215
    %v1217 = vand.u32 %v1216, 4294901760
    %v1218 = vsub.f32 %v1216, %v1217
    %v1219 = vand.u32 %v1218, 4294901760
    %1220 = vmatpush1.xpose.msra.mxu0 %v1219
    %1221 = vmatprep.subr.mxu0 0.0
    %v1222 = vand.u32 %v86, 4294901760
    %v1223 = vsub.f32 %v86, %v1222
    %v1224 = vand.u32 %v1223, 4294901760
    %v1225 = vsub.f32 %v1223, %v1224
    %v1226 = vand.u32 %v1225, 4294901760
    %1227 = vmatpush1.xpose.msra.mxu0 %v1226
    %1228 = vmatprep.subr.mxu0 0.0
    %v1229 = vand.u32 %v87, 4294901760
    %v1230 = vsub.f32 %v87, %v1229
    %v1231 = vand.u32 %v1230, 4294901760
    %v1232 = vsub.f32 %v1230, %v1231
    %v1233 = vand.u32 %v1232, 4294901760
    %1234 = vmatpush1.xpose.msra.mxu0 %v1233
    %1235 = vmatprep.subr.mxu0 0.0
    %v1236 = vand.u32 %v88, 4294901760
    %v1237 = vsub.f32 %v88, %v1236
    %v1238 = vand.u32 %v1237, 4294901760
    %v1239 = vsub.f32 %v1237, %v1238
    %v1240 = vand.u32 %v1239, 4294901760
    %1241 = vmatpush1.xpose.msra.mxu0 %v1240
    %1242 = vmatprep.subr.mxu0 0.0
    %v1243 = vand.u32 %v89, 4294901760
    %v1244 = vsub.f32 %v89, %v1243
    %v1245 = vand.u32 %v1244, 4294901760
    %v1246 = vsub.f32 %v1244, %v1245
    %v1247 = vand.u32 %v1246, 4294901760
    %1248 = vmatpush1.xpose.msra.mxu0 %v1247
    %1249 = vmatprep.subr.mxu0 0.0
    %v1250 = vand.u32 %v90, 4294901760
    %v1251 = vsub.f32 %v90, %v1250
    %v1252 = vand.u32 %v1251, 4294901760
    %v1253 = vsub.f32 %v1251, %v1252
    %v1254 = vand.u32 %v1253, 4294901760
    %1255 = vmatpush1.xpose.msra.mxu0 %v1254
    %1256 = vmatprep.subr.mxu0 0.0
    %v1257 = vand.u32 %v91, 4294901760
    %v1258 = vsub.f32 %v91, %v1257
    %v1259 = vand.u32 %v1258, 4294901760
    %v1260 = vsub.f32 %v1258, %v1259
    %v1261 = vand.u32 %v1260, 4294901760
    %1262 = vmatpush1.xpose.msra.mxu0 %v1261
    %1263 = vmatprep.subr.mxu0 0.0
    %v1264 = vand.u32 %v92, 4294901760
    %v1265 = vsub.f32 %v92, %v1264
    %v1266 = vand.u32 %v1265, 4294901760
    %v1267 = vsub.f32 %v1265, %v1266
    %v1268 = vand.u32 %v1267, 4294901760
    %1269 = vmatpush1.xpose.msra.mxu0 %v1268
    %1270 = vmatprep.subr.mxu0 0.0
    %v1271 = vand.u32 %v93, 4294901760
    %v1272 = vsub.f32 %v93, %v1271
    %v1273 = vand.u32 %v1272, 4294901760
    %v1274 = vsub.f32 %v1272, %v1273
    %v1275 = vand.u32 %v1274, 4294901760
    %1276 = vmatpush1.xpose.msra.mxu0 %v1275
    %1277 = vmatprep.subr.mxu0 0.0
    %v1278 = vand.u32 %v94, 4294901760
    %v1279 = vsub.f32 %v94, %v1278
    %v1280 = vand.u32 %v1279, 4294901760
    %v1281 = vsub.f32 %v1279, %v1280
    %v1282 = vand.u32 %v1281, 4294901760
    %1283 = vmatpush1.xpose.msra.mxu0 %v1282
    %1284 = vmatprep.mubr.f32.mxu0 0.0
    %v1285 = vand.u32 %v30, 4294901760
    %1286 = vmatmul.mubr.f32.gmra.mrb[0].mxu0 %v1285
    %v1287 = vpop.f32.mrb[0].mxu0
    %v1288 = vadd.f32 %v1056, %v1287
    %v1289 = vpop.f32.mrb[0].mxu0
    %v1290 = vadd.f32 %v1058, %v1289
    %1291 = vdwg.mxu0
    %1292 = vmatprep.subr.mxu0 0.0
    %v1293 = vand.u32 %v63, 4294901760
    %v1294 = vsub.f32 %v63, %v1293
    %1295 = vmatpush1.xpose.msra.mxu0 %v1294
    %1296 = vmatprep.subr.mxu0 0.0
    %v1297 = vand.u32 %v64, 4294901760
    %v1298 = vsub.f32 %v64, %v1297
    %1299 = vmatpush1.xpose.msra.mxu0 %v1298
    %1300 = vmatprep.subr.mxu0 0.0
    %v1301 = vand.u32 %v65, 4294901760
    %v1302 = vsub.f32 %v65, %v1301
    %1303 = vmatpush1.xpose.msra.mxu0 %v1302
    %1304 = vmatprep.subr.mxu0 0.0
    %v1305 = vand.u32 %v66, 4294901760
    %v1306 = vsub.f32 %v66, %v1305
    %1307 = vmatpush1.xpose.msra.mxu0 %v1306
    %1308 = vmatprep.subr.mxu0 0.0
    %v1309 = vand.u32 %v67, 4294901760
    %v1310 = vsub.f32 %v67, %v1309
    %1311 = vmatpush1.xpose.msra.mxu0 %v1310
    %1312 = vmatprep.subr.mxu0 0.0
    %v1313 = vand.u32 %v68, 4294901760
    %v1314 = vsub.f32 %v68, %v1313
    %1315 = vmatpush1.xpose.msra.mxu0 %v1314
    %1316 = vmatprep.subr.mxu0 0.0
    %v1317 = vand.u32 %v69, 4294901760
    %v1318 = vsub.f32 %v69, %v1317
    %1319 = vmatpush1.xpose.msra.mxu0 %v1318
    %1320 = vmatprep.subr.mxu0 0.0
    %v1321 = vand.u32 %v70, 4294901760
    %v1322 = vsub.f32 %v70, %v1321
    %1323 = vmatpush1.xpose.msra.mxu0 %v1322
    %1324 = vmatprep.subr.mxu0 0.0
    %v1325 = vand.u32 %v71, 4294901760
    %v1326 = vsub.f32 %v71, %v1325
    %1327 = vmatpush1.xpose.msra.mxu0 %v1326
    %1328 = vmatprep.subr.mxu0 0.0
    %v1329 = vand.u32 %v72, 4294901760
    %v1330 = vsub.f32 %v72, %v1329
    %1331 = vmatpush1.xpose.msra.mxu0 %v1330
    %1332 = vmatprep.subr.mxu0 0.0
    %v1333 = vand.u32 %v73, 4294901760
    %v1334 = vsub.f32 %v73, %v1333
    %1335 = vmatpush1.xpose.msra.mxu0 %v1334
    %1336 = vmatprep.subr.mxu0 0.0
    %v1337 = vand.u32 %v74, 4294901760
    %v1338 = vsub.f32 %v74, %v1337
    %1339 = vmatpush1.xpose.msra.mxu0 %v1338
    %1340 = vmatprep.subr.mxu0 0.0
    %v1341 = vand.u32 %v75, 4294901760
    %v1342 = vsub.f32 %v75, %v1341
    %1343 = vmatpush1.xpose.msra.mxu0 %v1342
    %1344 = vmatprep.subr.mxu0 0.0
    %v1345 = vand.u32 %v76, 4294901760
    %v1346 = vsub.f32 %v76, %v1345
    %1347 = vmatpush1.xpose.msra.mxu0 %v1346
    %1348 = vmatprep.subr.mxu0 0.0
    %v1349 = vand.u32 %v77, 4294901760
    %v1350 = vsub.f32 %v77, %v1349
    %1351 = vmatpush1.xpose.msra.mxu0 %v1350
    %1352 = vmatprep.subr.mxu0 0.0
    %v1353 = vand.u32 %v78, 4294901760
    %v1354 = vsub.f32 %v78, %v1353
    %1355 = vmatpush1.xpose.msra.mxu0 %v1354
    %1356 = vmatprep.subr.mxu0 0.0
    %v1357 = vand.u32 %v79, 4294901760
    %v1358 = vsub.f32 %v79, %v1357
    %1359 = vmatpush1.xpose.msra.mxu0 %v1358
    %1360 = vmatprep.subr.mxu0 0.0
    %v1361 = vand.u32 %v80, 4294901760
    %v1362 = vsub.f32 %v80, %v1361
    %1363 = vmatpush1.xpose.msra.mxu0 %v1362
    %1364 = vmatprep.subr.mxu0 0.0
    %v1365 = vand.u32 %v81, 4294901760
    %v1366 = vsub.f32 %v81, %v1365
    %1367 = vmatpush1.xpose.msra.mxu0 %v1366
    %1368 = vmatprep.subr.mxu0 0.0
    %v1369 = vand.u32 %v82, 4294901760
    %v1370 = vsub.f32 %v82, %v1369
    %1371 = vmatpush1.xpose.msra.mxu0 %v1370
    %1372 = vmatprep.subr.mxu0 0.0
    %v1373 = vand.u32 %v83, 4294901760
    %v1374 = vsub.f32 %v83, %v1373
    %1375 = vmatpush1.xpose.msra.mxu0 %v1374
    %1376 = vmatprep.subr.mxu0 0.0
    %v1377 = vand.u32 %v84, 4294901760
    %v1378 = vsub.f32 %v84, %v1377
    %1379 = vmatpush1.xpose.msra.mxu0 %v1378
    %1380 = vmatprep.subr.mxu0 0.0
    %v1381 = vand.u32 %v85, 4294901760
    %v1382 = vsub.f32 %v85, %v1381
    %1383 = vmatpush1.xpose.msra.mxu0 %v1382
    %1384 = vmatprep.subr.mxu0 0.0
    %v1385 = vand.u32 %v86, 4294901760
    %v1386 = vsub.f32 %v86, %v1385
    %1387 = vmatpush1.xpose.msra.mxu0 %v1386
    %1388 = vmatprep.subr.mxu0 0.0
    %v1389 = vand.u32 %v87, 4294901760
    %v1390 = vsub.f32 %v87, %v1389
    %1391 = vmatpush1.xpose.msra.mxu0 %v1390
    %1392 = vmatprep.subr.mxu0 0.0
    %v1393 = vand.u32 %v88, 4294901760
    %v1394 = vsub.f32 %v88, %v1393
    %1395 = vmatpush1.xpose.msra.mxu0 %v1394
    %1396 = vmatprep.subr.mxu0 0.0
    %v1397 = vand.u32 %v89, 4294901760
    %v1398 = vsub.f32 %v89, %v1397
    %1399 = vmatpush1.xpose.msra.mxu0 %v1398
    %1400 = vmatprep.subr.mxu0 0.0
    %v1401 = vand.u32 %v90, 4294901760
    %v1402 = vsub.f32 %v90, %v1401
    %1403 = vmatpush1.xpose.msra.mxu0 %v1402
    %1404 = vmatprep.subr.mxu0 0.0
    %v1405 = vand.u32 %v91, 4294901760
    %v1406 = vsub.f32 %v91, %v1405
    %1407 = vmatpush1.xpose.msra.mxu0 %v1406
    %1408 = vmatprep.subr.mxu0 0.0
    %v1409 = vand.u32 %v92, 4294901760
    %v1410 = vsub.f32 %v92, %v1409
    %1411 = vmatpush1.xpose.msra.mxu0 %v1410
    %1412 = vmatprep.subr.mxu0 0.0
    %v1413 = vand.u32 %v93, 4294901760
    %v1414 = vsub.f32 %v93, %v1413
    %1415 = vmatpush1.xpose.msra.mxu0 %v1414
    %1416 = vmatprep.subr.mxu0 0.0
    %v1417 = vand.u32 %v94, 4294901760
    %v1418 = vsub.f32 %v94, %v1417
    %1419 = vmatpush1.xpose.msra.mxu0 %v1418
    %1420 = vmatprep.mubr.f32.mxu0 0.0
    %v1421 = vand.u32 %v30, 4294901760
    %v1422 = vsub.f32 %v30, %v1421
    %1423 = vmatmul.mubr.f32.gmra.mrb[0].mxu0 %v1422
    %v1424 = vpop.f32.mrb[0].mxu0
    %v1425 = vadd.f32 %v1288, %v1424
    %v1426 = vpop.f32.mrb[0].mxu0
    %v1427 = vadd.f32 %v1290, %v1426
    %1428 = vdwg.mxu0
    %1429 = vmatprep.subr.mxu0 0.0
    %v1430 = vand.u32 %v63, 4294901760
    %1431 = vmatpush1.xpose.msra.mxu0 %v1430
    %1432 = vmatprep.subr.mxu0 0.0
    %v1433 = vand.u32 %v64, 4294901760
    %1434 = vmatpush1.xpose.msra.mxu0 %v1433
    %1435 = vmatprep.subr.mxu0 0.0
    %v1436 = vand.u32 %v65, 4294901760
    %1437 = vmatpush1.xpose.msra.mxu0 %v1436
    %1438 = vmatprep.subr.mxu0 0.0
    %v1439 = vand.u32 %v66, 4294901760
    %1440 = vmatpush1.xpose.msra.mxu0 %v1439
    %1441 = vmatprep.subr.mxu0 0.0
    %v1442 = vand.u32 %v67, 4294901760
    %1443 = vmatpush1.xpose.msra.mxu0 %v1442
    %1444 = vmatprep.subr.mxu0 0.0
    %v1445 = vand.u32 %v68, 4294901760
    %1446 = vmatpush1.xpose.msra.mxu0 %v1445
    %1447 = vmatprep.subr.mxu0 0.0
    %v1448 = vand.u32 %v69, 4294901760
    %1449 = vmatpush1.xpose.msra.mxu0 %v1448
    %1450 = vmatprep.subr.mxu0 0.0
    %v1451 = vand.u32 %v70, 4294901760
    %1452 = vmatpush1.xpose.msra.mxu0 %v1451
    %1453 = vmatprep.subr.mxu0 0.0
    %v1454 = vand.u32 %v71, 4294901760
    %1455 = vmatpush1.xpose.msra.mxu0 %v1454
    %1456 = vmatprep.subr.mxu0 0.0
    %v1457 = vand.u32 %v72, 4294901760
    %1458 = vmatpush1.xpose.msra.mxu0 %v1457
    %1459 = vmatprep.subr.mxu0 0.0
    %v1460 = vand.u32 %v73, 4294901760
    %1461 = vmatpush1.xpose.msra.mxu0 %v1460
    %1462 = vmatprep.subr.mxu0 0.0
    %v1463 = vand.u32 %v74, 4294901760
    %1464 = vmatpush1.xpose.msra.mxu0 %v1463
    %1465 = vmatprep.subr.mxu0 0.0
    %v1466 = vand.u32 %v75, 4294901760
    %1467 = vmatpush1.xpose.msra.mxu0 %v1466
    %1468 = vmatprep.subr.mxu0 0.0
    %v1469 = vand.u32 %v76, 4294901760
    %1470 = vmatpush1.xpose.msra.mxu0 %v1469
    %1471 = vmatprep.subr.mxu0 0.0
    %v1472 = vand.u32 %v77, 4294901760
    %1473 = vmatpush1.xpose.msra.mxu0 %v1472
    %1474 = vmatprep.subr.mxu0 0.0
    %v1475 = vand.u32 %v78, 4294901760
    %1476 = vmatpush1.xpose.msra.mxu0 %v1475
    %1477 = vmatprep.subr.mxu0 0.0
    %v1478 = vand.u32 %v79, 4294901760
    %1479 = vmatpush1.xpose.msra.mxu0 %v1478
    %1480 = vmatprep.subr.mxu0 0.0
    %v1481 = vand.u32 %v80, 4294901760
    %1482 = vmatpush1.xpose.msra.mxu0 %v1481
    %1483 = vmatprep.subr.mxu0 0.0
    %v1484 = vand.u32 %v81, 4294901760
    %1485 = vmatpush1.xpose.msra.mxu0 %v1484
    %1486 = vmatprep.subr.mxu0 0.0
    %v1487 = vand.u32 %v82, 4294901760
    %1488 = vmatpush1.xpose.msra.mxu0 %v1487
    %1489 = vmatprep.subr.mxu0 0.0
    %v1490 = vand.u32 %v83, 4294901760
    %1491 = vmatpush1.xpose.msra.mxu0 %v1490
    %1492 = vmatprep.subr.mxu0 0.0
    %v1493 = vand.u32 %v84, 4294901760
    %1494 = vmatpush1.xpose.msra.mxu0 %v1493
    %1495 = vmatprep.subr.mxu0 0.0
    %v1496 = vand.u32 %v85, 4294901760
    %1497 = vmatpush1.xpose.msra.mxu0 %v1496
    %1498 = vmatprep.subr.mxu0 0.0
    %v1499 = vand.u32 %v86, 4294901760
    %1500 = vmatpush1.xpose.msra.mxu0 %v1499
    %1501 = vmatprep.subr.mxu0 0.0
    %v1502 = vand.u32 %v87, 4294901760
    %1503 = vmatpush1.xpose.msra.mxu0 %v1502
    %1504 = vmatprep.subr.mxu0 0.0
    %v1505 = vand.u32 %v88, 4294901760
    %1506 = vmatpush1.xpose.msra.mxu0 %v1505
    %1507 = vmatprep.subr.mxu0 0.0
    %v1508 = vand.u32 %v89, 4294901760
    %1509 = vmatpush1.xpose.msra.mxu0 %v1508
    %1510 = vmatprep.subr.mxu0 0.0
    %v1511 = vand.u32 %v90, 4294901760
    %1512 = vmatpush1.xpose.msra.mxu0 %v1511
    %1513 = vmatprep.subr.mxu0 0.0
    %v1514 = vand.u32 %v91, 4294901760
    %1515 = vmatpush1.xpose.msra.mxu0 %v1514
    %1516 = vmatprep.subr.mxu0 0.0
    %v1517 = vand.u32 %v92, 4294901760
    %1518 = vmatpush1.xpose.msra.mxu0 %v1517
    %1519 = vmatprep.subr.mxu0 0.0
    %v1520 = vand.u32 %v93, 4294901760
    %1521 = vmatpush1.xpose.msra.mxu0 %v1520
    %1522 = vmatprep.subr.mxu0 0.0
    %v1523 = vand.u32 %v94, 4294901760
    %1524 = vmatpush1.xpose.msra.mxu0 %v1523
    %1525 = vmatprep.mubr.f32.mxu0 0.0
    %v1526 = vand.u32 %v30, 4294901760
    %v1527 = vsub.f32 %v30, %v1526
    %v1528 = vand.u32 %v1527, 4294901760
    %1529 = vmatmul.mubr.f32.gmra.mrb[0].mxu0 %v1528
    %v1530 = vpop.f32.mrb[0].mxu0
    %v1531 = vadd.f32 %v1425, %v1530
    %v1532 = vpop.f32.mrb[0].mxu0
    %v1533 = vadd.f32 %v1427, %v1532
    %1534 = vdwg.mxu0
    %1535 = vmatprep.subr.mxu0 0.0
    %v1536 = vand.u32 %v63, 4294901760
    %v1537 = vsub.f32 %v63, %v1536
    %v1538 = vand.u32 %v1537, 4294901760
    %1539 = vmatpush1.xpose.msra.mxu0 %v1538
    %1540 = vmatprep.subr.mxu0 0.0
    %v1541 = vand.u32 %v64, 4294901760
    %v1542 = vsub.f32 %v64, %v1541
    %v1543 = vand.u32 %v1542, 4294901760
    %1544 = vmatpush1.xpose.msra.mxu0 %v1543
    %1545 = vmatprep.subr.mxu0 0.0
    %v1546 = vand.u32 %v65, 4294901760
    %v1547 = vsub.f32 %v65, %v1546
    %v1548 = vand.u32 %v1547, 4294901760
    %1549 = vmatpush1.xpose.msra.mxu0 %v1548
    %1550 = vmatprep.subr.mxu0 0.0
    %v1551 = vand.u32 %v66, 4294901760
    %v1552 = vsub.f32 %v66, %v1551
    %v1553 = vand.u32 %v1552, 4294901760
    %1554 = vmatpush1.xpose.msra.mxu0 %v1553
    %1555 = vmatprep.subr.mxu0 0.0
    %v1556 = vand.u32 %v67, 4294901760
    %v1557 = vsub.f32 %v67, %v1556
    %v1558 = vand.u32 %v1557, 4294901760
    %1559 = vmatpush1.xpose.msra.mxu0 %v1558
    %1560 = vmatprep.subr.mxu0 0.0
    %v1561 = vand.u32 %v68, 4294901760
    %v1562 = vsub.f32 %v68, %v1561
    %v1563 = vand.u32 %v1562, 4294901760
    %1564 = vmatpush1.xpose.msra.mxu0 %v1563
    %1565 = vmatprep.subr.mxu0 0.0
    %v1566 = vand.u32 %v69, 4294901760
    %v1567 = vsub.f32 %v69, %v1566
    %v1568 = vand.u32 %v1567, 4294901760
    %1569 = vmatpush1.xpose.msra.mxu0 %v1568
    %1570 = vmatprep.subr.mxu0 0.0
    %v1571 = vand.u32 %v70, 4294901760
    %v1572 = vsub.f32 %v70, %v1571
    %v1573 = vand.u32 %v1572, 4294901760
    %1574 = vmatpush1.xpose.msra.mxu0 %v1573
    %1575 = vmatprep.subr.mxu0 0.0
    %v1576 = vand.u32 %v71, 4294901760
    %v1577 = vsub.f32 %v71, %v1576
    %v1578 = vand.u32 %v1577, 4294901760
    %1579 = vmatpush1.xpose.msra.mxu0 %v1578
    %1580 = vmatprep.subr.mxu0 0.0
    %v1581 = vand.u32 %v72, 4294901760
    %v1582 = vsub.f32 %v72, %v1581
    %v1583 = vand.u32 %v1582, 4294901760
    %1584 = vmatpush1.xpose.msra.mxu0 %v1583
    %1585 = vmatprep.subr.mxu0 0.0
    %v1586 = vand.u32 %v73, 4294901760
    %v1587 = vsub.f32 %v73, %v1586
    %v1588 = vand.u32 %v1587, 4294901760
    %1589 = vmatpush1.xpose.msra.mxu0 %v1588
    %1590 = vmatprep.subr.mxu0 0.0
    %v1591 = vand.u32 %v74, 4294901760
    %v1592 = vsub.f32 %v74, %v1591
    %v1593 = vand.u32 %v1592, 4294901760
    %1594 = vmatpush1.xpose.msra.mxu0 %v1593
    %1595 = vmatprep.subr.mxu0 0.0
    %v1596 = vand.u32 %v75, 4294901760
    %v1597 = vsub.f32 %v75, %v1596
    %v1598 = vand.u32 %v1597, 4294901760
    %1599 = vmatpush1.xpose.msra.mxu0 %v1598
    %1600 = vmatprep.subr.mxu0 0.0
    %v1601 = vand.u32 %v76, 4294901760
    %v1602 = vsub.f32 %v76, %v1601
    %v1603 = vand.u32 %v1602, 4294901760
    %1604 = vmatpush1.xpose.msra.mxu0 %v1603
    %1605 = vmatprep.subr.mxu0 0.0
    %v1606 = vand.u32 %v77, 4294901760
    %v1607 = vsub.f32 %v77, %v1606
    %v1608 = vand.u32 %v1607, 4294901760
    %1609 = vmatpush1.xpose.msra.mxu0 %v1608
    %1610 = vmatprep.subr.mxu0 0.0
    %v1611 = vand.u32 %v78, 4294901760
    %v1612 = vsub.f32 %v78, %v1611
    %v1613 = vand.u32 %v1612, 4294901760
    %1614 = vmatpush1.xpose.msra.mxu0 %v1613
    %1615 = vmatprep.subr.mxu0 0.0
    %v1616 = vand.u32 %v79, 4294901760
    %v1617 = vsub.f32 %v79, %v1616
    %v1618 = vand.u32 %v1617, 4294901760
    %1619 = vmatpush1.xpose.msra.mxu0 %v1618
    %1620 = vmatprep.subr.mxu0 0.0
    %v1621 = vand.u32 %v80, 4294901760
    %v1622 = vsub.f32 %v80, %v1621
    %v1623 = vand.u32 %v1622, 4294901760
    %1624 = vmatpush1.xpose.msra.mxu0 %v1623
    %1625 = vmatprep.subr.mxu0 0.0
    %v1626 = vand.u32 %v81, 4294901760
    %v1627 = vsub.f32 %v81, %v1626
    %v1628 = vand.u32 %v1627, 4294901760
    %1629 = vmatpush1.xpose.msra.mxu0 %v1628
    %1630 = vmatprep.subr.mxu0 0.0
    %v1631 = vand.u32 %v82, 4294901760
    %v1632 = vsub.f32 %v82, %v1631
    %v1633 = vand.u32 %v1632, 4294901760
    %1634 = vmatpush1.xpose.msra.mxu0 %v1633
    %1635 = vmatprep.subr.mxu0 0.0
    %v1636 = vand.u32 %v83, 4294901760
    %v1637 = vsub.f32 %v83, %v1636
    %v1638 = vand.u32 %v1637, 4294901760
    %1639 = vmatpush1.xpose.msra.mxu0 %v1638
    %1640 = vmatprep.subr.mxu0 0.0
    %v1641 = vand.u32 %v84, 4294901760
    %v1642 = vsub.f32 %v84, %v1641
    %v1643 = vand.u32 %v1642, 4294901760
    %1644 = vmatpush1.xpose.msra.mxu0 %v1643
    %1645 = vmatprep.subr.mxu0 0.0
    %v1646 = vand.u32 %v85, 4294901760
    %v1647 = vsub.f32 %v85, %v1646
    %v1648 = vand.u32 %v1647, 4294901760
    %1649 = vmatpush1.xpose.msra.mxu0 %v1648
    %1650 = vmatprep.subr.mxu0 0.0
    %v1651 = vand.u32 %v86, 4294901760
    %v1652 = vsub.f32 %v86, %v1651
    %v1653 = vand.u32 %v1652, 4294901760
    %1654 = vmatpush1.xpose.msra.mxu0 %v1653
    %1655 = vmatprep.subr.mxu0 0.0
    %v1656 = vand.u32 %v87, 4294901760
    %v1657 = vsub.f32 %v87, %v1656
    %v1658 = vand.u32 %v1657, 4294901760
    %1659 = vmatpush1.xpose.msra.mxu0 %v1658
    %1660 = vmatprep.subr.mxu0 0.0
    %v1661 = vand.u32 %v88, 4294901760
    %v1662 = vsub.f32 %v88, %v1661
    %v1663 = vand.u32 %v1662, 4294901760
    %1664 = vmatpush1.xpose.msra.mxu0 %v1663
    %1665 = vmatprep.subr.mxu0 0.0
    %v1666 = vand.u32 %v89, 4294901760
    %v1667 = vsub.f32 %v89, %v1666
    %v1668 = vand.u32 %v1667, 4294901760
    %1669 = vmatpush1.xpose.msra.mxu0 %v1668
    %1670 = vmatprep.subr.mxu0 0.0
    %v1671 = vand.u32 %v90, 4294901760
    %v1672 = vsub.f32 %v90, %v1671
    %v1673 = vand.u32 %v1672, 4294901760
    %1674 = vmatpush1.xpose.msra.mxu0 %v1673
    %1675 = vmatprep.subr.mxu0 0.0
    %v1676 = vand.u32 %v91, 4294901760
    %v1677 = vsub.f32 %v91, %v1676
    %v1678 = vand.u32 %v1677, 4294901760
    %1679 = vmatpush1.xpose.msra.mxu0 %v1678
    %1680 = vmatprep.subr.mxu0 0.0
    %v1681 = vand.u32 %v92, 4294901760
    %v1682 = vsub.f32 %v92, %v1681
    %v1683 = vand.u32 %v1682, 4294901760
    %1684 = vmatpush1.xpose.msra.mxu0 %v1683
    %1685 = vmatprep.subr.mxu0 0.0
    %v1686 = vand.u32 %v93, 4294901760
    %v1687 = vsub.f32 %v93, %v1686
    %v1688 = vand.u32 %v1687, 4294901760
    %1689 = vmatpush1.xpose.msra.mxu0 %v1688
    %1690 = vmatprep.subr.mxu0 0.0
    %v1691 = vand.u32 %v94, 4294901760
    %v1692 = vsub.f32 %v94, %v1691
    %v1693 = vand.u32 %v1692, 4294901760
    %1694 = vmatpush1.xpose.msra.mxu0 %v1693
    %1695 = vmatprep.mubr.f32.mxu0 0.0
    %v1696 = vand.u32 %v30, 4294901760
    %1697 = vmatmul.mubr.f32.gmra.mrb[0].mxu0 %v1696
    %v1698 = vpop.f32.mrb[0].mxu0
    %v1699 = vadd.f32 %v1531, %v1698
    %v1700 = vpop.f32.mrb[0].mxu0
    %v1701 = vadd.f32 %v1533, %v1700
    %1702 = vdwg.mxu0
    %1703 = vmatprep.subr.mxu0 0.0
    %v1704 = vand.u32 %v63, 4294901760
    %1705 = vmatpush1.xpose.msra.mxu0 %v1704
    %1706 = vmatprep.subr.mxu0 0.0
    %v1707 = vand.u32 %v64, 4294901760
    %1708 = vmatpush1.xpose.msra.mxu0 %v1707
    %1709 = vmatprep.subr.mxu0 0.0
    %v1710 = vand.u32 %v65, 4294901760
    %1711 = vmatpush1.xpose.msra.mxu0 %v1710
    %1712 = vmatprep.subr.mxu0 0.0
    %v1713 = vand.u32 %v66, 4294901760
    %1714 = vmatpush1.xpose.msra.mxu0 %v1713
    %1715 = vmatprep.subr.mxu0 0.0
    %v1716 = vand.u32 %v67, 4294901760
    %1717 = vmatpush1.xpose.msra.mxu0 %v1716
    %1718 = vmatprep.subr.mxu0 0.0
    %v1719 = vand.u32 %v68, 4294901760
    %1720 = vmatpush1.xpose.msra.mxu0 %v1719
    %1721 = vmatprep.subr.mxu0 0.0
    %v1722 = vand.u32 %v69, 4294901760
    %1723 = vmatpush1.xpose.msra.mxu0 %v1722
    %1724 = vmatprep.subr.mxu0 0.0
    %v1725 = vand.u32 %v70, 4294901760
    %1726 = vmatpush1.xpose.msra.mxu0 %v1725
    %1727 = vmatprep.subr.mxu0 0.0
    %v1728 = vand.u32 %v71, 4294901760
    %1729 = vmatpush1.xpose.msra.mxu0 %v1728
    %1730 = vmatprep.subr.mxu0 0.0
    %v1731 = vand.u32 %v72, 4294901760
    %1732 = vmatpush1.xpose.msra.mxu0 %v1731
    %1733 = vmatprep.subr.mxu0 0.0
    %v1734 = vand.u32 %v73, 4294901760
    %1735 = vmatpush1.xpose.msra.mxu0 %v1734
    %1736 = vmatprep.subr.mxu0 0.0
    %v1737 = vand.u32 %v74, 4294901760
    %1738 = vmatpush1.xpose.msra.mxu0 %v1737
    %1739 = vmatprep.subr.mxu0 0.0
    %v1740 = vand.u32 %v75, 4294901760
    %1741 = vmatpush1.xpose.msra.mxu0 %v1740
    %1742 = vmatprep.subr.mxu0 0.0
    %v1743 = vand.u32 %v76, 4294901760
    %1744 = vmatpush1.xpose.msra.mxu0 %v1743
    %1745 = vmatprep.subr.mxu0 0.0
    %v1746 = vand.u32 %v77, 4294901760
    %1747 = vmatpush1.xpose.msra.mxu0 %v1746
    %1748 = vmatprep.subr.mxu0 0.0
    %v1749 = vand.u32 %v78, 4294901760
    %1750 = vmatpush1.xpose.msra.mxu0 %v1749
    %1751 = vmatprep.subr.mxu0 0.0
    %v1752 = vand.u32 %v79, 4294901760
    %1753 = vmatpush1.xpose.msra.mxu0 %v1752
    %1754 = vmatprep.subr.mxu0 0.0
    %v1755 = vand.u32 %v80, 4294901760
    %1756 = vmatpush1.xpose.msra.mxu0 %v1755
    %1757 = vmatprep.subr.mxu0 0.0
    %v1758 = vand.u32 %v81, 4294901760
    %1759 = vmatpush1.xpose.msra.mxu0 %v1758
    %1760 = vmatprep.subr.mxu0 0.0
    %v1761 = vand.u32 %v82, 4294901760
    %1762 = vmatpush1.xpose.msra.mxu0 %v1761
    %1763 = vmatprep.subr.mxu0 0.0
    %v1764 = vand.u32 %v83, 4294901760
    %1765 = vmatpush1.xpose.msra.mxu0 %v1764
    %1766 = vmatprep.subr.mxu0 0.0
    %v1767 = vand.u32 %v84, 4294901760
    %1768 = vmatpush1.xpose.msra.mxu0 %v1767
    %1769 = vmatprep.subr.mxu0 0.0
    %v1770 = vand.u32 %v85, 4294901760
    %1771 = vmatpush1.xpose.msra.mxu0 %v1770
    %1772 = vmatprep.subr.mxu0 0.0
    %v1773 = vand.u32 %v86, 4294901760
    %1774 = vmatpush1.xpose.msra.mxu0 %v1773
    %1775 = vmatprep.subr.mxu0 0.0
    %v1776 = vand.u32 %v87, 4294901760
    %1777 = vmatpush1.xpose.msra.mxu0 %v1776
    %1778 = vmatprep.subr.mxu0 0.0
    %v1779 = vand.u32 %v88, 4294901760
    %1780 = vmatpush1.xpose.msra.mxu0 %v1779
    %1781 = vmatprep.subr.mxu0 0.0
    %v1782 = vand.u32 %v89, 4294901760
    %1783 = vmatpush1.xpose.msra.mxu0 %v1782
    %1784 = vmatprep.subr.mxu0 0.0
    %v1785 = vand.u32 %v90, 4294901760
    %1786 = vmatpush1.xpose.msra.mxu0 %v1785
    %1787 = vmatprep.subr.mxu0 0.0
    %v1788 = vand.u32 %v91, 4294901760
    %1789 = vmatpush1.xpose.msra.mxu0 %v1788
    %1790 = vmatprep.subr.mxu0 0.0
    %v1791 = vand.u32 %v92, 4294901760
    %1792 = vmatpush1.xpose.msra.mxu0 %v1791
    %1793 = vmatprep.subr.mxu0 0.0
    %v1794 = vand.u32 %v93, 4294901760
    %1795 = vmatpush1.xpose.msra.mxu0 %v1794
    %1796 = vmatprep.subr.mxu0 0.0
    %v1797 = vand.u32 %v94, 4294901760
    %1798 = vmatpush1.xpose.msra.mxu0 %v1797
    %1799 = vmatprep.mubr.f32.mxu0 0.0
    %v1800 = vand.u32 %v30, 4294901760
    %1801 = vmatmul.mubr.f32.gmra.mrb[0].mxu0 %v1800
    %v1802 = vpop.f32.mrb[0].mxu0
    %v1803 = vadd.f32 %v1699, %v1802
    %v1804 = vpop.f32.mrb[0].mxu0
    %v1805 = vadd.f32 %v1701, %v1804
    %1806 = vdwg.mxu0
    %v1811 = vcombine.low %v948, %v950
    %v1812 = vcombine.low %v1803, %v1805
    %1815 = vst [vmem:[#allocation6] sm:$0xff] %v1811
    %1816 = vst [vmem:[#allocation6 + $0x8] sm:$0xff] %v1812
    // Predicated region
    $region18: #{tpu_custom_call.1} parent=1 // pred_check
      _
    $region19: #{tpu_custom_call.1} parent=1 // pred_check_branch
      %1818 = sbr.rel (0) target = $region21
    $region20: #{tpu_custom_call.1} parent=1 // pred_region
      %s1820 = ssub.s32 256, 256
      %1821 = vsyncadd [#allocation5], %s1820
      %s1823 = sshll.u32 [#allocation6], 4
      %s1824 = int_to_ptr.vmem [resolvable:$true] %s1823
      %1826 = dma.vmem_to_hbm [thread:$0]  %s1824, 256, %s3, [#allocation5]
    $region21: #{tpu_custom_call.1} parent=1 // pred_fallthru
      _
    // Predicated region
    $region22: #{tpu_custom_call.1} parent=1 // pred_check
      _
    $region23: #{tpu_custom_call.1} parent=1 // pred_check_branch
      %1828 = sbr.rel (0) target = $region25
    $region24: #{tpu_custom_call.1} parent=1 // pred_region
      %1829 = dma.done [#allocation5], 256
    $region25: #{tpu_custom_call.1} parent=1 // pred_fallthru
      _
    %1830 = vsyncpa [#allocation4], 1
    %1831 = vsyncpa [#allocation5], 1

</llo_original>
